<compile_context>
chip_gen: v7x
topology: tpu7x:2x2x1
jax: 0.10.0
libtpu: 0.0.40
codegen_flags: <defaults>
</compile_context>

<pallas_src>
import math

import jax
import jax.numpy as jnp
from jax.experimental import pallas as pl

# ---- model hyper-parameters (small, consistent with the module) ----
D_MODEL = 32
N_HEAD = 4
MLP_RATIO = 4.0
MLP_WIDTH = int(D_MODEL * MLP_RATIO)      # 128
SEQ = 8
BATCH = 2
ROWS = SEQ * BATCH                        # 16
HEAD_DIM = D_MODEL // N_HEAD              # 8
LN_EPS = 1e-5
NEG_INF = -1e30
PACK_LANES = 128                          # width of the packed small-operand tile


def _layernorm(v, w_row, b_row):
    """LayerNorm over the last axis (biased variance, matches F.layer_norm)."""
    mu = jnp.mean(v, axis=-1, keepdims=True)
    c = v - mu
    var = jnp.mean(c * c, axis=-1, keepdims=True)
    return c * jax.lax.rsqrt(var + LN_EPS) * w_row + b_row


def _gelu_exact(v):
    """torch.nn.GELU() default: erf-based (not the tanh approximation)."""
    return 0.5 * v * (1.0 + jax.lax.erf(v * (1.0 / math.sqrt(2.0))))


def residual_attention_block_kernel(
    x_ref,      # (ROWS, D)   rows in (L, N) order -> batch id of row r is r % BATCH
    vec_ref,    # (8, 128)    all 1-row params packed lane-dense (see prepare_params)
    wqkv_ref,   # (D, 3D)     fused in_proj, pre-transposed, 1/sqrt(dh) folded into q
    wo_ref,     # (D, D)      out_proj_w.T
    wfc_ref,    # (D, W)      c_fc weight, pre-transposed
    wpr_ref,    # (W, D)      c_proj weight, pre-transposed
    o_ref,      # (ROWS, D)
):
    D, H, dh, R = D_MODEL, N_HEAD, HEAD_DIM, ROWS
    x = x_ref[...].astype(jnp.float32)

    # Static row/lane slices of the single packed small-operand tile.
    ln1_w = vec_ref[0:1, :D]
    ln1_b = vec_ref[1:2, :D]
    ln2_w = vec_ref[2:3, :D]
    ln2_b = vec_ref[3:4, :D]
    bqkv = vec_ref[4:5, :3 * D]
    bo = vec_ref[5:6, :D]
    bfc = vec_ref[6:7, :MLP_WIDTH]
    bpr = vec_ref[7:8, :D]

    # ---- attention branch: ln_1 -> fused QKV -> per-head attention -> out proj ----
    h = _layernorm(x, ln1_w, ln1_b)                                     # (R, D)
    qkv = jnp.dot(h, wqkv_ref[...],
                  preferred_element_type=jnp.float32) + bqkv            # (R, 3D)

    # Block-diagonal batch mask built in-kernel (no operand DMA, no wrapper ops).
    ri = jax.lax.broadcasted_iota(jnp.int32, (R, R), 0)
    ci = jax.lax.broadcasted_iota(jnp.int32, (R, R), 1)
    same_batch = (ri % BATCH) == (ci % BATCH)
    # TODO(synk): an explicit attn_mask (None by default in the module) is not plumbed in.

    # Per-head attention.  The head loop is fully unrolled (H=4); scores / AV are
    # intrinsically per-head MXU passes, but every operand here is a plain lane
    # slice of qkv, so there are no head-splitting reshapes or broadcasts.
    o_heads = []
    for hd in range(H):
        qh = qkv[:, 0 * D + hd * dh: 0 * D + (hd + 1) * dh]             # (R, dh)
        kh = qkv[:, 1 * D + hd * dh: 1 * D + (hd + 1) * dh]             # (R, dh)
        vh = qkv[:, 2 * D + hd * dh: 2 * D + (hd + 1) * dh]             # (R, dh)
        s = jnp.dot(qh, kh.T, preferred_element_type=jnp.float32)       # (R, R)
        s = jnp.where(same_batch, s, NEG_INF)
        s = s - jnp.max(s, axis=-1, keepdims=True)
        p = jnp.exp(s)
        p = p / jnp.sum(p, axis=-1, keepdims=True)                      # exact softmax
        o_heads.append(jnp.dot(p, vh, preferred_element_type=jnp.float32))

    o = jnp.concatenate(o_heads, axis=1)                                # (R, D) head concat
    attn = jnp.dot(o, wo_ref[...],
                   preferred_element_type=jnp.float32) + bo             # one K=32 matmul

    x1 = x + attn                     # ln_attn is nn.Identity (scale_attn=False)

    # ---- MLP branch: ln_2 -> c_fc -> GELU -> c_proj ----
    h2 = _layernorm(x1, ln2_w, ln2_b)
    fc = _gelu_exact(jnp.dot(h2, wfc_ref[...],
                             preferred_element_type=jnp.float32) + bfc)  # (R, W)
    proj = jnp.dot(fc, wpr_ref[...],
                   preferred_element_type=jnp.float32) + bpr             # (R, D)

    o_ref[...] = (x1 + proj).astype(o_ref.dtype)


@jax.jit
def residual_attention_block(x_lnd, kp):
    """x_lnd: (L, N, D) float32, PyTorch (seq, batch, d_model) layout."""
    L, N, D = x_lnd.shape
    # No transpose: keep (L, N) row order; batch separation is handled by the
    # in-kernel block-diagonal mask (batch id of row r is r % N).
    x2 = x_lnd.reshape(L * N, D)
    out2 = pl.pallas_call(
        residual_attention_block_kernel,
        out_shape=jax.ShapeDtypeStruct((L * N, D), x_lnd.dtype),
        # TODO(synk): this grid=() all-resident design keeps the full (H,R,R)
        # scores and all weights in VMEM; add a ("parallel", ...) grid axis /
        # flash-style KV tiling before scaling SEQ/BATCH (esp. on v7x: 2 TCs,
        # 64 MiB VMEM).
    )(x2, kp["vecs"], kp["wqkv"], kp["wo"], kp["wfc"], kp["wpr"])
    return out2.reshape(L, N, D)


def init_params(key):
    """Raw parameters in the PyTorch module's native layout."""
    ks = jax.random.split(key, 8)
    s = 0.02
    return {
        "ln1_w": jnp.ones((D_MODEL,), jnp.float32),
        "ln1_b": jnp.zeros((D_MODEL,), jnp.float32),
        "ln2_w": jnp.ones((D_MODEL,), jnp.float32),
        "ln2_b": jnp.zeros((D_MODEL,), jnp.float32),
        "in_proj_w": s * jax.random.normal(ks[0], (3 * D_MODEL, D_MODEL), jnp.float32),
        "in_proj_b": s * jax.random.normal(ks[1], (3 * D_MODEL,), jnp.float32),
        "out_proj_w": s * jax.random.normal(ks[2], (D_MODEL, D_MODEL), jnp.float32),
        "out_proj_b": s * jax.random.normal(ks[3], (D_MODEL,), jnp.float32),
        "fc_w": s * jax.random.normal(ks[4], (MLP_WIDTH, D_MODEL), jnp.float32),
        "fc_b": s * jax.random.normal(ks[5], (MLP_WIDTH,), jnp.float32),
        "proj_w": s * jax.random.normal(ks[6], (D_MODEL, MLP_WIDTH), jnp.float32),
        "proj_b": s * jax.random.normal(ks[7], (D_MODEL,), jnp.float32),
    }


def prepare_params(p):
    """One-time kernel-oriented parameter layout (parameter-prep time, not per call):
      * every weight pre-transposed so the kernel never takes W.T
      * q/k/v fused into one (D, 3D) weight and one (1, 3D) bias;
        the 1/sqrt(head_dim) scale is folded into the q block of both
      * all 1-row operands packed into a single lane-dense (8, 128) f32 tile
    """
    D, dh = D_MODEL, HEAD_DIM
    scale = 1.0 / math.sqrt(dh)

    wq = p["in_proj_w"][0 * D:1 * D] * scale      # (D, D) torch layout (out, in)
    wk = p["in_proj_w"][1 * D:2 * D]
    wv = p["in_proj_w"][2 * D:3 * D]
    bq = p["in_proj_b"][0 * D:1 * D] * scale
    bk = p["in_proj_b"][1 * D:2 * D]
    bv = p["in_proj_b"][2 * D:3 * D]

    # torch: q = x @ Wq.T + bq  ->  fused: qkv = h @ [Wq.T | Wk.T | Wv.T] + [bq|bk|bv]
    wqkv = jnp.concatenate([wq.T, wk.T, wv.T], axis=1)            # (D, 3D)
    bqkv = jnp.concatenate([bq, bk, bv])                          # (3D,)

    def pad_row(v):
        return jnp.pad(v, (0, PACK_LANES - v.shape[0])).reshape(1, PACK_LANES)

    vecs = jnp.concatenate([
        pad_row(p["ln1_w"]), pad_row(p["ln1_b"]),
        pad_row(p["ln2_w"]), pad_row(p["ln2_b"]),
        pad_row(bqkv),       pad_row(p["out_proj_b"]),
        pad_row(p["fc_b"]),  pad_row(p["proj_b"]),
    ], axis=0)                                                    # (8, 128)

    return {
        "vecs": vecs,                   # (8, 128) packed small operands
        "wqkv": wqkv,                   # (32, 96)
        "wo": p["out_proj_w"].T,        # (32, 32)
        "wfc": p["fc_w"].T,             # (32, 128)
        "wpr": p["proj_w"].T,           # (128, 32)
    }


if __name__ == "__main__":
    key = jax.random.PRNGKey(0)
    k_x, k_p = jax.random.split(key)
    # PyTorch layout: (L, N, D) = (seq, batch, d_model)
    x = jax.random.normal(k_x, (SEQ, BATCH, D_MODEL), jnp.float32)
    params = prepare_params(init_params(k_p))

    y = residual_attention_block(x, params)
    jax.block_until_ready(y)
    assert y.shape == (SEQ, BATCH, D_MODEL)
    assert bool(jnp.all(jnp.isfinite(y)))
    print("KERNEL_OK")
</pallas_src>

<mosaic_0001>
module attributes {stable_mosaic.version = 11 : i64} {
  func.func @residual_attention_block_kernel(%arg0: memref<16x32xf32, #tpu.memory_space<vmem>>, %arg1: memref<8x128xf32, #tpu.memory_space<vmem>>, %arg2: memref<32x96xf32, #tpu.memory_space<vmem>>, %arg3: memref<32x32xf32, #tpu.memory_space<vmem>>, %arg4: memref<32x128xf32, #tpu.memory_space<vmem>>, %arg5: memref<128x32xf32, #tpu.memory_space<vmem>>, %arg6: memref<16x32xf32, #tpu.memory_space<vmem>>) attributes {dimension_semantics = [], scalar_prefetch = 0 : i64, scratch_operands = 0 : i64, tpu.core_type = #tpu.core_type<tc>} {
    %c0 = arith.constant 0 : index
    %c0_0 = arith.constant 0 : index
    %0 = vector.load %arg0[%c0, %c0_0] : memref<16x32xf32, #tpu.memory_space<vmem>>, vector<16x32xf32>
    %c0_1 = arith.constant 0 : index
    %c0_2 = arith.constant 0 : index
    %1 = vector.load %arg1[%c0_1, %c0_2] : memref<8x128xf32, #tpu.memory_space<vmem>>, vector<1x32xf32>
    %c1 = arith.constant 1 : index
    %c0_3 = arith.constant 0 : index
    %2 = vector.load %arg1[%c1, %c0_3] : memref<8x128xf32, #tpu.memory_space<vmem>>, vector<1x32xf32>
    %c2 = arith.constant 2 : index
    %c0_4 = arith.constant 0 : index
    %3 = vector.load %arg1[%c2, %c0_4] : memref<8x128xf32, #tpu.memory_space<vmem>>, vector<1x32xf32>
    %c3 = arith.constant 3 : index
    %c0_5 = arith.constant 0 : index
    %4 = vector.load %arg1[%c3, %c0_5] : memref<8x128xf32, #tpu.memory_space<vmem>>, vector<1x32xf32>
    %c4 = arith.constant 4 : index
    %c0_6 = arith.constant 0 : index
    %5 = vector.load %arg1[%c4, %c0_6] : memref<8x128xf32, #tpu.memory_space<vmem>>, vector<1x96xf32>
    %c5 = arith.constant 5 : index
    %c0_7 = arith.constant 0 : index
    %6 = vector.load %arg1[%c5, %c0_7] : memref<8x128xf32, #tpu.memory_space<vmem>>, vector<1x32xf32>
    %c6 = arith.constant 6 : index
    %c0_8 = arith.constant 0 : index
    %7 = vector.load %arg1[%c6, %c0_8] : memref<8x128xf32, #tpu.memory_space<vmem>>, vector<1x128xf32>
    %c7 = arith.constant 7 : index
    %c0_9 = arith.constant 0 : index
    %8 = vector.load %arg1[%c7, %c0_9] : memref<8x128xf32, #tpu.memory_space<vmem>>, vector<1x32xf32>
    %cst = arith.constant dense<0.000000e+00> : vector<16xf32>
    %9 = vector.multi_reduction <add>, %0, %cst [1] : vector<16x32xf32> to vector<16xf32>
    %10 = vector.shape_cast %9 : vector<16xf32> to vector<16x1xf32>
    %cst_10 = arith.constant 3.200000e+01 : f32
    %11 = vector.broadcast %cst_10 : f32 to vector<16x1xf32>
    %12 = arith.divf %10, %11 : vector<16x1xf32>
    %13 = vector.broadcast %12 : vector<16x1xf32> to vector<16x32xf32>
    %14 = arith.subf %0, %13 : vector<16x32xf32>
    %15 = arith.mulf %14, %14 : vector<16x32xf32>
    %cst_11 = arith.constant dense<0.000000e+00> : vector<16xf32>
    %16 = vector.multi_reduction <add>, %15, %cst_11 [1] : vector<16x32xf32> to vector<16xf32>
    %17 = vector.shape_cast %16 : vector<16xf32> to vector<16x1xf32>
    %cst_12 = arith.constant 3.200000e+01 : f32
    %18 = vector.broadcast %cst_12 : f32 to vector<16x1xf32>
    %19 = arith.divf %17, %18 : vector<16x1xf32>
    %cst_13 = arith.constant 9.99999974E-6 : f32
    %20 = vector.broadcast %cst_13 : f32 to vector<16x1xf32>
    %21 = arith.addf %19, %20 : vector<16x1xf32>
    %22 = math.rsqrt %21 : vector<16x1xf32>
    %23 = vector.broadcast %22 : vector<16x1xf32> to vector<16x32xf32>
    %24 = arith.mulf %14, %23 : vector<16x32xf32>
    %25 = vector.broadcast %1 : vector<1x32xf32> to vector<16x32xf32>
    %26 = arith.mulf %24, %25 : vector<16x32xf32>
    %27 = vector.broadcast %2 : vector<1x32xf32> to vector<16x32xf32>
    %28 = arith.addf %26, %27 : vector<16x32xf32>
    %c0_14 = arith.constant 0 : index
    %c0_15 = arith.constant 0 : index
    %29 = vector.load %arg2[%c0_14, %c0_15] : memref<32x96xf32, #tpu.memory_space<vmem>>, vector<32x96xf32>
    %cst_16 = arith.constant dense<0.000000e+00> : vector<16x96xf32>
    %30 = tpu.matmul %28, %29, %cst_16 {dimension_numbers = #tpu.dot_dimension_numbers<[1], [0], [0], [1], [0, 0, 1, 1], [], []>} : vector<16x32xf32>, vector<32x96xf32>, vector<16x96xf32> -> vector<16x96xf32>
    %31 = vector.broadcast %5 : vector<1x96xf32> to vector<16x96xf32>
    %32 = arith.addf %30, %31 : vector<16x96xf32>
    %33 = tpu.iota {dimensions = array<i32: 0>} : vector<16x16xi32>
    %34 = tpu.iota {dimensions = array<i32: 1>} : vector<16x16xi32>
    %c2_i32 = arith.constant 2 : i32
    %c0_i32 = arith.constant 0 : i32
    %35 = arith.cmpi eq, %c2_i32, %c0_i32 : i32
    %c1_i32 = arith.constant 1 : i32
    %36 = arith.select %35, %c1_i32, %c2_i32 : i32
    %37 = vector.broadcast %36 : i32 to vector<16x16xi32>
    %38 = arith.remsi %33, %37 : vector<16x16xi32>
    %c0_i32_17 = arith.constant 0 : i32
    %39 = vector.broadcast %c0_i32_17 : i32 to vector<16x16xi32>
    %40 = arith.cmpi ne, %38, %39 : vector<16x16xi32>
    %c0_i32_18 = arith.constant 0 : i32
    %41 = vector.broadcast %c0_i32_18 : i32 to vector<16x16xi32>
    %42 = arith.cmpi slt, %38, %41 : vector<16x16xi32>
    %c0_i32_19 = arith.constant 0 : i32
    %43 = arith.cmpi slt, %36, %c0_i32_19 : i32
    %44 = vector.broadcast %43 : i1 to vector<16x16xi1>
    %45 = vector.broadcast %44 : vector<16x16xi1> to vector<16x16xi1>
    %46 = arith.xori %42, %45 : vector<16x16xi1>
    %47 = arith.andi %46, %40 : vector<16x16xi1>
    %48 = vector.broadcast %36 : i32 to vector<16x16xi32>
    %49 = arith.addi %38, %48 : vector<16x16xi32>
    %50 = arith.select %47, %49, %38 : vector<16x16xi1>, vector<16x16xi32>
    %c2_i32_20 = arith.constant 2 : i32
    %c0_i32_21 = arith.constant 0 : i32
    %51 = arith.cmpi eq, %c2_i32_20, %c0_i32_21 : i32
    %c1_i32_22 = arith.constant 1 : i32
    %52 = arith.select %51, %c1_i32_22, %c2_i32_20 : i32
    %53 = vector.broadcast %52 : i32 to vector<16x16xi32>
    %54 = arith.remsi %34, %53 : vector<16x16xi32>
    %c0_i32_23 = arith.constant 0 : i32
    %55 = vector.broadcast %c0_i32_23 : i32 to vector<16x16xi32>
    %56 = arith.cmpi ne, %54, %55 : vector<16x16xi32>
    %c0_i32_24 = arith.constant 0 : i32
    %57 = vector.broadcast %c0_i32_24 : i32 to vector<16x16xi32>
    %58 = arith.cmpi slt, %54, %57 : vector<16x16xi32>
    %c0_i32_25 = arith.constant 0 : i32
    %59 = arith.cmpi slt, %52, %c0_i32_25 : i32
    %60 = vector.broadcast %59 : i1 to vector<16x16xi1>
    %61 = vector.broadcast %60 : vector<16x16xi1> to vector<16x16xi1>
    %62 = arith.xori %58, %61 : vector<16x16xi1>
    %63 = arith.andi %62, %56 : vector<16x16xi1>
    %64 = vector.broadcast %52 : i32 to vector<16x16xi32>
    %65 = arith.addi %54, %64 : vector<16x16xi32>
    %66 = arith.select %63, %65, %54 : vector<16x16xi1>, vector<16x16xi32>
    %67 = arith.cmpi eq, %50, %66 : vector<16x16xi32>
    %68 = vector.extract_strided_slice %32 {offsets = [0, 0], sizes = [16, 8], strides = [1, 1]} : vector<16x96xf32> to vector<16x8xf32>
    %69 = vector.extract_strided_slice %32 {offsets = [0, 32], sizes = [16, 8], strides = [1, 1]} : vector<16x96xf32> to vector<16x8xf32>
    %70 = vector.extract_strided_slice %32 {offsets = [0, 64], sizes = [16, 8], strides = [1, 1]} : vector<16x96xf32> to vector<16x8xf32>
    %71 = tpu.transpose %69, [1, 0] : vector<16x8xf32> -> vector<8x16xf32>
    %cst_26 = arith.constant dense<0.000000e+00> : vector<16x16xf32>
    %72 = tpu.matmul %68, %71, %cst_26 {dimension_numbers = #tpu.dot_dimension_numbers<[1], [0], [0], [1], [0, 0, 1, 1], [], []>} : vector<16x8xf32>, vector<8x16xf32>, vector<16x16xf32> -> vector<16x16xf32>
    %cst_27 = arith.constant -1.000000e+30 : f32
    %73 = vector.broadcast %cst_27 : f32 to vector<16x16xf32>
    %74 = arith.select %67, %72, %73 : vector<16x16xi1>, vector<16x16xf32>
    %cst_28 = arith.constant dense<0xFF800000> : vector<16xf32>
    %75 = vector.multi_reduction <maximumf>, %74, %cst_28 [1] : vector<16x16xf32> to vector<16xf32>
    %76 = vector.shape_cast %75 : vector<16xf32> to vector<16x1xf32>
    %77 = vector.broadcast %76 : vector<16x1xf32> to vector<16x16xf32>
    %78 = arith.subf %74, %77 : vector<16x16xf32>
    %79 = math.exp %78 : vector<16x16xf32>
    %cst_29 = arith.constant dense<0.000000e+00> : vector<16xf32>
    %80 = vector.multi_reduction <add>, %79, %cst_29 [1] : vector<16x16xf32> to vector<16xf32>
    %81 = vector.shape_cast %80 : vector<16xf32> to vector<16x1xf32>
    %82 = vector.broadcast %81 : vector<16x1xf32> to vector<16x16xf32>
    %83 = arith.divf %79, %82 : vector<16x16xf32>
    %cst_30 = arith.constant dense<0.000000e+00> : vector<16x8xf32>
    %84 = tpu.matmul %83, %70, %cst_30 {dimension_numbers = #tpu.dot_dimension_numbers<[1], [0], [0], [1], [0, 0, 1, 1], [], []>} : vector<16x16xf32>, vector<16x8xf32>, vector<16x8xf32> -> vector<16x8xf32>
    %85 = vector.extract_strided_slice %32 {offsets = [0, 8], sizes = [16, 8], strides = [1, 1]} : vector<16x96xf32> to vector<16x8xf32>
    %86 = vector.extract_strided_slice %32 {offsets = [0, 40], sizes = [16, 8], strides = [1, 1]} : vector<16x96xf32> to vector<16x8xf32>
    %87 = vector.extract_strided_slice %32 {offsets = [0, 72], sizes = [16, 8], strides = [1, 1]} : vector<16x96xf32> to vector<16x8xf32>
    %88 = tpu.transpose %86, [1, 0] : vector<16x8xf32> -> vector<8x16xf32>
    %cst_31 = arith.constant dense<0.000000e+00> : vector<16x16xf32>
    %89 = tpu.matmul %85, %88, %cst_31 {dimension_numbers = #tpu.dot_dimension_numbers<[1], [0], [0], [1], [0, 0, 1, 1], [], []>} : vector<16x8xf32>, vector<8x16xf32>, vector<16x16xf32> -> vector<16x16xf32>
    %cst_32 = arith.constant -1.000000e+30 : f32
    %90 = vector.broadcast %cst_32 : f32 to vector<16x16xf32>
    %91 = arith.select %67, %89, %90 : vector<16x16xi1>, vector<16x16xf32>
    %cst_33 = arith.constant dense<0xFF800000> : vector<16xf32>
    %92 = vector.multi_reduction <maximumf>, %91, %cst_33 [1] : vector<16x16xf32> to vector<16xf32>
    %93 = vector.shape_cast %92 : vector<16xf32> to vector<16x1xf32>
    %94 = vector.broadcast %93 : vector<16x1xf32> to vector<16x16xf32>
    %95 = arith.subf %91, %94 : vector<16x16xf32>
    %96 = math.exp %95 : vector<16x16xf32>
    %cst_34 = arith.constant dense<0.000000e+00> : vector<16xf32>
    %97 = vector.multi_reduction <add>, %96, %cst_34 [1] : vector<16x16xf32> to vector<16xf32>
    %98 = vector.shape_cast %97 : vector<16xf32> to vector<16x1xf32>
    %99 = vector.broadcast %98 : vector<16x1xf32> to vector<16x16xf32>
    %100 = arith.divf %96, %99 : vector<16x16xf32>
    %cst_35 = arith.constant dense<0.000000e+00> : vector<16x8xf32>
    %101 = tpu.matmul %100, %87, %cst_35 {dimension_numbers = #tpu.dot_dimension_numbers<[1], [0], [0], [1], [0, 0, 1, 1], [], []>} : vector<16x16xf32>, vector<16x8xf32>, vector<16x8xf32> -> vector<16x8xf32>
    %102 = vector.extract_strided_slice %32 {offsets = [0, 16], sizes = [16, 8], strides = [1, 1]} : vector<16x96xf32> to vector<16x8xf32>
    %103 = vector.extract_strided_slice %32 {offsets = [0, 48], sizes = [16, 8], strides = [1, 1]} : vector<16x96xf32> to vector<16x8xf32>
    %104 = vector.extract_strided_slice %32 {offsets = [0, 80], sizes = [16, 8], strides = [1, 1]} : vector<16x96xf32> to vector<16x8xf32>
    %105 = tpu.transpose %103, [1, 0] : vector<16x8xf32> -> vector<8x16xf32>
    %cst_36 = arith.constant dense<0.000000e+00> : vector<16x16xf32>
    %106 = tpu.matmul %102, %105, %cst_36 {dimension_numbers = #tpu.dot_dimension_numbers<[1], [0], [0], [1], [0, 0, 1, 1], [], []>} : vector<16x8xf32>, vector<8x16xf32>, vector<16x16xf32> -> vector<16x16xf32>
    %cst_37 = arith.constant -1.000000e+30 : f32
    %107 = vector.broadcast %cst_37 : f32 to vector<16x16xf32>
    %108 = arith.select %67, %106, %107 : vector<16x16xi1>, vector<16x16xf32>
    %cst_38 = arith.constant dense<0xFF800000> : vector<16xf32>
    %109 = vector.multi_reduction <maximumf>, %108, %cst_38 [1] : vector<16x16xf32> to vector<16xf32>
    %110 = vector.shape_cast %109 : vector<16xf32> to vector<16x1xf32>
    %111 = vector.broadcast %110 : vector<16x1xf32> to vector<16x16xf32>
    %112 = arith.subf %108, %111 : vector<16x16xf32>
    %113 = math.exp %112 : vector<16x16xf32>
    %cst_39 = arith.constant dense<0.000000e+00> : vector<16xf32>
    %114 = vector.multi_reduction <add>, %113, %cst_39 [1] : vector<16x16xf32> to vector<16xf32>
    %115 = vector.shape_cast %114 : vector<16xf32> to vector<16x1xf32>
    %116 = vector.broadcast %115 : vector<16x1xf32> to vector<16x16xf32>
    %117 = arith.divf %113, %116 : vector<16x16xf32>
    %cst_40 = arith.constant dense<0.000000e+00> : vector<16x8xf32>
    %118 = tpu.matmul %117, %104, %cst_40 {dimension_numbers = #tpu.dot_dimension_numbers<[1], [0], [0], [1], [0, 0, 1, 1], [], []>} : vector<16x16xf32>, vector<16x8xf32>, vector<16x8xf32> -> vector<16x8xf32>
    %119 = vector.extract_strided_slice %32 {offsets = [0, 24], sizes = [16, 8], strides = [1, 1]} : vector<16x96xf32> to vector<16x8xf32>
    %120 = vector.extract_strided_slice %32 {offsets = [0, 56], sizes = [16, 8], strides = [1, 1]} : vector<16x96xf32> to vector<16x8xf32>
    %121 = vector.extract_strided_slice %32 {offsets = [0, 88], sizes = [16, 8], strides = [1, 1]} : vector<16x96xf32> to vector<16x8xf32>
    %122 = tpu.transpose %120, [1, 0] : vector<16x8xf32> -> vector<8x16xf32>
    %cst_41 = arith.constant dense<0.000000e+00> : vector<16x16xf32>
    %123 = tpu.matmul %119, %122, %cst_41 {dimension_numbers = #tpu.dot_dimension_numbers<[1], [0], [0], [1], [0, 0, 1, 1], [], []>} : vector<16x8xf32>, vector<8x16xf32>, vector<16x16xf32> -> vector<16x16xf32>
    %cst_42 = arith.constant -1.000000e+30 : f32
    %124 = vector.broadcast %cst_42 : f32 to vector<16x16xf32>
    %125 = arith.select %67, %123, %124 : vector<16x16xi1>, vector<16x16xf32>
    %cst_43 = arith.constant dense<0xFF800000> : vector<16xf32>
    %126 = vector.multi_reduction <maximumf>, %125, %cst_43 [1] : vector<16x16xf32> to vector<16xf32>
    %127 = vector.shape_cast %126 : vector<16xf32> to vector<16x1xf32>
    %128 = vector.broadcast %127 : vector<16x1xf32> to vector<16x16xf32>
    %129 = arith.subf %125, %128 : vector<16x16xf32>
    %130 = math.exp %129 : vector<16x16xf32>
    %cst_44 = arith.constant dense<0.000000e+00> : vector<16xf32>
    %131 = vector.multi_reduction <add>, %130, %cst_44 [1] : vector<16x16xf32> to vector<16xf32>
    %132 = vector.shape_cast %131 : vector<16xf32> to vector<16x1xf32>
    %133 = vector.broadcast %132 : vector<16x1xf32> to vector<16x16xf32>
    %134 = arith.divf %130, %133 : vector<16x16xf32>
    %cst_45 = arith.constant dense<0.000000e+00> : vector<16x8xf32>
    %135 = tpu.matmul %134, %121, %cst_45 {dimension_numbers = #tpu.dot_dimension_numbers<[1], [0], [0], [1], [0, 0, 1, 1], [], []>} : vector<16x16xf32>, vector<16x8xf32>, vector<16x8xf32> -> vector<16x8xf32>
    %136 = tpu.concatenate %84, %101, %118, %135 in 1 : vector<16x8xf32>, vector<16x8xf32>, vector<16x8xf32>, vector<16x8xf32> -> vector<16x32xf32>
    %c0_46 = arith.constant 0 : index
    %c0_47 = arith.constant 0 : index
    %137 = vector.load %arg3[%c0_46, %c0_47] : memref<32x32xf32, #tpu.memory_space<vmem>>, vector<32x32xf32>
    %cst_48 = arith.constant dense<0.000000e+00> : vector<16x32xf32>
    %138 = tpu.matmul %136, %137, %cst_48 {dimension_numbers = #tpu.dot_dimension_numbers<[1], [0], [0], [1], [0, 0, 1, 1], [], []>} : vector<16x32xf32>, vector<32x32xf32>, vector<16x32xf32> -> vector<16x32xf32>
    %139 = vector.broadcast %6 : vector<1x32xf32> to vector<16x32xf32>
    %140 = arith.addf %138, %139 : vector<16x32xf32>
    %141 = arith.addf %0, %140 : vector<16x32xf32>
    %cst_49 = arith.constant dense<0.000000e+00> : vector<16xf32>
    %142 = vector.multi_reduction <add>, %141, %cst_49 [1] : vector<16x32xf32> to vector<16xf32>
    %143 = vector.shape_cast %142 : vector<16xf32> to vector<16x1xf32>
    %cst_50 = arith.constant 3.200000e+01 : f32
    %144 = vector.broadcast %cst_50 : f32 to vector<16x1xf32>
    %145 = arith.divf %143, %144 : vector<16x1xf32>
    %146 = vector.broadcast %145 : vector<16x1xf32> to vector<16x32xf32>
    %147 = arith.subf %141, %146 : vector<16x32xf32>
    %148 = arith.mulf %147, %147 : vector<16x32xf32>
    %cst_51 = arith.constant dense<0.000000e+00> : vector<16xf32>
    %149 = vector.multi_reduction <add>, %148, %cst_51 [1] : vector<16x32xf32> to vector<16xf32>
    %150 = vector.shape_cast %149 : vector<16xf32> to vector<16x1xf32>
    %cst_52 = arith.constant 3.200000e+01 : f32
    %151 = vector.broadcast %cst_52 : f32 to vector<16x1xf32>
    %152 = arith.divf %150, %151 : vector<16x1xf32>
    %cst_53 = arith.constant 9.99999974E-6 : f32
    %153 = vector.broadcast %cst_53 : f32 to vector<16x1xf32>
    %154 = arith.addf %152, %153 : vector<16x1xf32>
    %155 = math.rsqrt %154 : vector<16x1xf32>
    %156 = vector.broadcast %155 : vector<16x1xf32> to vector<16x32xf32>
    %157 = arith.mulf %147, %156 : vector<16x32xf32>
    %158 = vector.broadcast %3 : vector<1x32xf32> to vector<16x32xf32>
    %159 = arith.mulf %157, %158 : vector<16x32xf32>
    %160 = vector.broadcast %4 : vector<1x32xf32> to vector<16x32xf32>
    %161 = arith.addf %159, %160 : vector<16x32xf32>
    %c0_54 = arith.constant 0 : index
    %c0_55 = arith.constant 0 : index
    %162 = vector.load %arg4[%c0_54, %c0_55] : memref<32x128xf32, #tpu.memory_space<vmem>>, vector<32x128xf32>
    %cst_56 = arith.constant dense<0.000000e+00> : vector<16x128xf32>
    %163 = tpu.matmul %161, %162, %cst_56 {dimension_numbers = #tpu.dot_dimension_numbers<[1], [0], [0], [1], [0, 0, 1, 1], [], []>} : vector<16x32xf32>, vector<32x128xf32>, vector<16x128xf32> -> vector<16x128xf32>
    %164 = vector.broadcast %7 : vector<1x128xf32> to vector<16x128xf32>
    %165 = arith.addf %163, %164 : vector<16x128xf32>
    %cst_57 = arith.constant 5.000000e-01 : f32
    %166 = vector.broadcast %cst_57 : f32 to vector<16x128xf32>
    %167 = arith.mulf %166, %165 : vector<16x128xf32>
    %cst_58 = arith.constant 0.707106769 : f32
    %168 = vector.broadcast %cst_58 : f32 to vector<16x128xf32>
    %169 = arith.mulf %165, %168 : vector<16x128xf32>
    %170 = math.erf %169 : vector<16x128xf32>
    %cst_59 = arith.constant 1.000000e+00 : f32
    %171 = vector.broadcast %cst_59 : f32 to vector<16x128xf32>
    %172 = arith.addf %171, %170 : vector<16x128xf32>
    %173 = arith.mulf %167, %172 : vector<16x128xf32>
    %c0_60 = arith.constant 0 : index
    %c0_61 = arith.constant 0 : index
    %174 = vector.load %arg5[%c0_60, %c0_61] : memref<128x32xf32, #tpu.memory_space<vmem>>, vector<128x32xf32>
    %cst_62 = arith.constant dense<0.000000e+00> : vector<16x32xf32>
    %175 = tpu.matmul %173, %174, %cst_62 {dimension_numbers = #tpu.dot_dimension_numbers<[1], [0], [0], [1], [0, 0, 1, 1], [], []>} : vector<16x128xf32>, vector<128x32xf32>, vector<16x32xf32> -> vector<16x32xf32>
    %176 = vector.broadcast %8 : vector<1x32xf32> to vector<16x32xf32>
    %177 = arith.addf %175, %176 : vector<16x32xf32>
    %178 = arith.addf %141, %177 : vector<16x32xf32>
    %c0_63 = arith.constant 0 : index
    %c0_64 = arith.constant 0 : index
    %179 = vector.load %arg6[%c0_63, %c0_64] : memref<16x32xf32, #tpu.memory_space<vmem>>, vector<16x32xf32>
    tpu.vector_store %arg6[%c0_63, %c0_64], %178 {strides = array<i32>} : memref<16x32xf32, #tpu.memory_space<vmem>>, vector<16x32xf32>,
    return
  }
}

</mosaic_0001>

<llo_original>
// kernel: residual_attention_block.1
$region0: #{residual_attention_block.1}
  #allocation0 [shape = 'u32[]', space=smem, size = 0x4, offset = 0x4, fixed_abs, tag = 'smem constant byte address 0x4 - core index']
  #allocation1 [shape = 'u32[144,128]{1,0:T(1,128)}', space=vmem, size = 0x12000, scoped, tag = 'internal scratch']
  %s0 = inlined_call_operand.vmem [shape: f32[16,32], index: 0, kind: input, shape index: {}]
  %s1 = inlined_call_operand.vmem [shape: f32[8,128], index: 1, kind: input, shape index: {}]
  %s2 = inlined_call_operand.vmem [shape: f32[32,96], index: 2, kind: input, shape index: {}]
  %s3 = inlined_call_operand.vmem [shape: f32[32,32], index: 3, kind: input, shape index: {}]
  %s4 = inlined_call_operand.vmem [shape: f32[32,128], index: 4, kind: input, shape index: {}]
  %s5 = inlined_call_operand.vmem [shape: f32[128,32], index: 5, kind: input, shape index: {}]
  %s6 = inlined_call_operand.hbm [shape: f32[16,32], index: 6, kind: output, shape index: {}]
  %s7 = sld [smem:[#allocation0]]
  $region34: #{residual_attention_block.1} parent=0
    _
  %s9 = ssub.s32 1, %s7
  %s10 = scalar_select 0, %s9, %s7
  $region1: #{residual_attention_block.1} parent=0
    #allocation2 [shape = 'u8[8192]{0}', space=vmem, size = 0x2000, scoped, tag = 'output window, operand 0, single buffered']
    #allocation3 [shape = 's32[1]{0}', space=sflag, size = 0x4, scoped, tag = 'scoped memory for residual_attention_block.1']
    %11 = vsyncpa [#allocation3], 0
    // Predicated region
    $region2: #{residual_attention_block.1} parent=1 // pred_check
      _
    $region3: #{residual_attention_block.1} parent=1 // pred_check_branch
      %13 = sbr.rel (0) target = $region5
    $region4: #{residual_attention_block.1} parent=1 // pred_region
      _
    $region5: #{residual_attention_block.1} parent=1 // pred_fallthru
      _
    // Predicated region
    $region6: #{residual_attention_block.1} parent=1 // pred_check
      _
    $region7: #{residual_attention_block.1} parent=1 // pred_check_branch
      %15 = sbr.rel (0) target = $region9
    $region8: #{residual_attention_block.1} parent=1 // pred_region
      _
    $region9: #{residual_attention_block.1} parent=1 // pred_fallthru
      _
    // Predicated region
    $region10: #{residual_attention_block.1} parent=1 // pred_check
      _
    $region11: #{residual_attention_block.1} parent=1 // pred_check_branch
      %17 = sbr.rel (0) target = $region13
    $region12: #{residual_attention_block.1} parent=1 // pred_region
      _
    $region13: #{residual_attention_block.1} parent=1 // pred_fallthru
      _
    // Predicated region
    $region14: #{residual_attention_block.1} parent=1 // pred_check
      _
    $region15: #{residual_attention_block.1} parent=1 // pred_check_branch
      %19 = sbr.rel (0) target = $region17
    $region16: #{residual_attention_block.1} parent=1 // pred_region
      _
    $region17: #{residual_attention_block.1} parent=1 // pred_fallthru
      _
    // Predicated region
    $region18: #{residual_attention_block.1} parent=1 // pred_check
      _
    $region19: #{residual_attention_block.1} parent=1 // pred_check_branch
      %21 = sbr.rel (0) target = $region21
    $region20: #{residual_attention_block.1} parent=1 // pred_region
      _
    $region21: #{residual_attention_block.1} parent=1 // pred_fallthru
      _
    // Predicated region
    $region22: #{residual_attention_block.1} parent=1 // pred_check
      _
    $region23: #{residual_attention_block.1} parent=1 // pred_check_branch
      %23 = sbr.rel (0) target = $region25
    $region24: #{residual_attention_block.1} parent=1 // pred_region
      _
    $region25: #{residual_attention_block.1} parent=1 // pred_fallthru
      _
    %v24 = vld [vmem:[%s0] sm:$0xff]
    %v25 = vld [vmem:[%s0 + $0x8] sm:$0xff]
    %v26 = vld [vmem:[%s1] sm:$0x1]
    %v27 = vld [vmem:[%s1 + $0x1] sm:$0x1]
    %v28 = vld [vmem:[%s1 + $0x2] sm:$0x1]
    %v29 = vld [vmem:[%s1 + $0x3] sm:$0x1]
    %v30 = vld [vmem:[%s1 + $0x4] sm:$0x1]
    %v31 = vld [vmem:[%s1 + $0x5] sm:$0x1]
    %v32 = vld [vmem:[%s1 + $0x6] sm:$0x1]
    %v33 = vld [vmem:[%s1 + $0x7] sm:$0x1]
    %vm34 = vcmask 261120
    %v35 = vsel %vm34, %v24, 0.0
    %36 = vadd.xlane.f32.xlu0 %v35
    %v37 = vpop.xlane.xlu0 %36
    %v38 = vsel %vm34, %v25, 0.0
    %39 = vadd.xlane.f32.xlu0 %v38
    %v40 = vpop.xlane.xlu0 %39
    %v41 = vrcp.pop 32.0
    %v42 = vmul.f32 %v37, %v41
    %v43 = vmul.f32 %v40, %v41
    %v44 = vsub.f32 %v24, %v42
    %v45 = vsub.f32 %v25, %v43
    %v46 = vmul.f32 %v44, %v44
    %v47 = vmul.f32 %v45, %v45
    %v48 = vsel %vm34, %v46, 0.0
    %49 = vadd.xlane.f32.xlu0 %v48
    %v50 = vpop.xlane.xlu0 %49
    %v51 = vsel %vm34, %v47, 0.0
    %52 = vadd.xlane.f32.xlu0 %v51
    %v53 = vpop.xlane.xlu0 %52
    %v54 = vmul.f32 %v50, %v41
    %v55 = vmul.f32 %v53, %v41
    %v56 = vadd.f32 %v54, 1e-05
    %v57 = vadd.f32 %v55, 1e-05
    %v58 = vrsqrt.pop %v56
    %v59 = vrsqrt.pop %v57
    %v60 = vmul.f32 %v44, %v58
    %v61 = vmul.f32 %v45, %v59
    %v62 = vlaneseq
    %v63 = vshrl.u32 %v62, 7
    %v64 = vsub.s32 0, %v63
    %v65 = vrot.slane %v26, %v64
    %v66 = vmul.f32 %v60, %v65
    %v67 = vmul.f32 %v61, %v65
    %v68 = vlaneseq
    %v69 = vshrl.u32 %v68, 7
    %v70 = vsub.s32 0, %v69
    %v71 = vrot.slane %v27, %v70
    %v72 = vadd.f32 %v66, %v71
    %v73 = vadd.f32 %v67, %v71
    %v74 = vld [vmem:[%s2] sm:$0xff]
    %v75 = vld [vmem:[%s2 + $0x8] sm:$0xff]
    %v76 = vld [vmem:[%s2 + $0x10] sm:$0xff]
    %v77 = vld [vmem:[%s2 + $0x18] sm:$0xff]
    %v78 = vlaneseq
    %v79 = vshrl.u32 %v78, 7
    %v80 = vsub.s32 0, %v79
    %v81 = vrot.slane %v30, %v80
    %v83 = vsel %vm34, %v72, 0
    %v86 = vsel %vm34, %v73, 0
    %88 = vmatprep.subr.mxu0 0.0
    %89 = vmatpush1.msra.mxu0 %v74
    %90 = vmatprep.subr.mxu0 0.0
    %91 = vmatpush1.msra.mxu0 %v75
    %92 = vmatprep.subr.mxu0 0.0
    %93 = vmatpush1.msra.mxu0 %v76
    %94 = vmatprep.subr.mxu0 0.0
    %95 = vmatpush1.msra.mxu0 %v77
    %96 = vmatprep.subr.mxu0 0.0
    %97 = vmatpush1.msra.mxu0 0.0
    %98 = vmatprep.subr.mxu0 0.0
    %99 = vmatpush1.msra.mxu0 0.0
    %100 = vmatprep.subr.mxu0 0.0
    %101 = vmatpush1.msra.mxu0 0.0
    %102 = vmatprep.subr.mxu0 0.0
    %103 = vmatpush1.msra.mxu0 0.0
    %104 = vmatprep.subr.mxu0 0.0
    %105 = vmatpush1.msra.mxu0 0.0
    %106 = vmatprep.subr.mxu0 0.0
    %107 = vmatpush1.msra.mxu0 0.0
    %108 = vmatprep.subr.mxu0 0.0
    %109 = vmatpush1.msra.mxu0 0.0
    %110 = vmatprep.subr.mxu0 0.0
    %111 = vmatpush1.msra.mxu0 0.0
    %112 = vmatprep.subr.mxu0 0.0
    %113 = vmatpush1.msra.mxu0 0.0
    %114 = vmatprep.subr.mxu0 0.0
    %115 = vmatpush1.msra.mxu0 0.0
    %116 = vmatprep.subr.mxu0 0.0
    %117 = vmatpush1.msra.mxu0 0.0
    %118 = vmatprep.subr.mxu0 0.0
    %119 = vmatpush1.msra.mxu0 0.0
    %120 = vmatprep.subr.mxu0 0.0
    %121 = vmatpush1.msra.mxu0 0.0
    %122 = vmatprep.subr.mxu0 0.0
    %123 = vmatpush1.msra.mxu0 0.0
    %124 = vmatprep.subr.mxu0 0.0
    %125 = vmatpush1.msra.mxu0 0.0
    %126 = vmatprep.subr.mxu0 0.0
    %127 = vmatpush1.msra.mxu0 0.0
    %128 = vmatprep.subr.mxu0 0.0
    %129 = vmatpush1.msra.mxu0 0.0
    %130 = vmatprep.subr.mxu0 0.0
    %131 = vmatpush1.msra.mxu0 0.0
    %132 = vmatprep.subr.mxu0 0.0
    %133 = vmatpush1.msra.mxu0 0.0
    %134 = vmatprep.subr.mxu0 0.0
    %135 = vmatpush1.msra.mxu0 0.0
    %136 = vmatprep.subr.mxu0 0.0
    %137 = vmatpush1.msra.mxu0 0.0
    %138 = vmatprep.subr.mxu0 0.0
    %139 = vmatpush1.msra.mxu0 0.0
    %140 = vmatprep.subr.mxu0 0.0
    %141 = vmatpush1.msra.mxu0 0.0
    %142 = vmatprep.subr.mxu0 0.0
    %143 = vmatpush1.msra.mxu0 0.0
    %144 = vmatprep.subr.mxu0 0.0
    %145 = vmatpush1.msra.mxu0 0.0
    %146 = vmatprep.subr.mxu0 0.0
    %147 = vmatpush1.msra.mxu0 0.0
    %148 = vmatprep.subr.mxu0 0.0
    %149 = vmatpush1.msra.mxu0 0.0
    %150 = vmatprep.subr.mxu0 0.0
    %151 = vmatpush1.msra.mxu0 0.0
    %152 = vmatprep.mubr.f32.mxu0 0.0
    %153 = vmatmul.mubr.f32.gmra.mrb[0].mxu0 %v83
    %v154 = vpop.f32.mrb[0].mxu0
    %v155 = vadd.f32 %v81, %v154
    %v156 = vpop.f32.mrb[0].mxu0
    %157 = vmatprep.mubr.f32.mxu0 0.0
    %158 = vmatmul.mubr.f32.gmra.mrb[0].mxu0 %v86
    %v159 = vpop.f32.mrb[0].mxu0
    %v160 = vadd.f32 %v81, %v159
    %v161 = vpop.f32.mrb[0].mxu0
    %162 = vdwg.mxu0
    %v163 = vlaneseq
    %v164 = vshrl.u32 %v163, 7
    %v165 = vadd.s32 %v164, 8
    %v166 = vlaneseq
    %v167 = vand.u32 %v166, 127
    %vm168 = vcmp.lt.s32.totalorder %v164, 0
    %v169 = vsub.s32 0, %v164
    %v170 = vsel %vm168, %v169, %v164
    %v171 = vshrl.u32 %v170, 1
    %v172 = vand.u32 %v170, 1
    %v173 = vsub.s32 0, %v172
    %v174 = vsel %vm168, %v173, %v172
    %vm175 = vcmp.lt.s32.totalorder %v165, 0
    %v176 = vsub.s32 0, %v165
    %v177 = vsel %vm175, %v176, %v165
    %v178 = vshrl.u32 %v177, 1
    %v179 = vand.u32 %v177, 1
    %v180 = vsub.s32 0, %v179
    %v181 = vsel %vm175, %v180, %v179
    %vm182 = vcmp.ne.s32.totalorder %v174, 0
    %vm183 = vcmp.ne.s32.totalorder %v181, 0
    %vm184 = vcmp.lt.s32.totalorder %v174, 0
    %vm185 = vcmp.lt.s32.totalorder %v181, 0
    %vm186 = vmand %vm184, %vm182
    %vm187 = vmand %vm185, %vm183
    %v188 = vadd.s32 %v174, 2
    %v189 = vadd.s32 %v181, 2
    %v190 = vsel %vm186, %v188, %v174
    %v191 = vsel %vm187, %v189, %v181
    %vm192 = vcmp.lt.s32.totalorder %v167, 0
    %v193 = vsub.s32 0, %v167
    %v194 = vsel %vm192, %v193, %v167
    %v195 = vshrl.u32 %v194, 1
    %v196 = vand.u32 %v194, 1
    %v197 = vsub.s32 0, %v196
    %v198 = vsel %vm192, %v197, %v196
    %vm199 = vcmp.ne.s32.totalorder %v198, 0
    %vm200 = vcmp.lt.s32.totalorder %v198, 0
    %vm201 = vmand %vm200, %vm199
    %v202 = vadd.s32 %v198, 2
    %v203 = vsel %vm201, %v202, %v198
    %vm204 = vcmp.eq.s32.totalorder %v190, %v203
    %vm205 = vcmp.eq.s32.totalorder %v191, %v203
    %208 = vrot.lane.b32.xlu0 %v155, 96
    %v209 = vpop.permute.xlu0 %208
    %210 = vrot.lane.b32.xlu0 %v160, 96
    %v211 = vpop.permute.xlu0 %210
    %vm212 = vcmask 64512
    %v213 = vsel %vm212, %v155, 0
    %v215 = vsel %vm212, %v160, 0
    %v217 = vsel %vm212, %v209, 0
    %v219 = vsel %vm212, %v211, 0
    %221 = vmatprep.subr.mxu0 0.0
    %222 = vmatpush1.xpose.msra.mxu0 %v217
    %223 = vmatprep.subr.mxu0 0.0
    %224 = vmatpush1.xpose.msra.mxu0 %v219
    %225 = vmatprep.subr.mxu0 0.0
    %226 = vmatpush1.xpose.msra.mxu0 0.0
    %227 = vmatprep.subr.mxu0 0.0
    %228 = vmatpush1.xpose.msra.mxu0 0.0
    %229 = vmatprep.subr.mxu0 0.0
    %230 = vmatpush1.xpose.msra.mxu0 0.0
    %231 = vmatprep.subr.mxu0 0.0
    %232 = vmatpush1.xpose.msra.mxu0 0.0
    %233 = vmatprep.subr.mxu0 0.0
    %234 = vmatpush1.xpose.msra.mxu0 0.0
    %235 = vmatprep.subr.mxu0 0.0
    %236 = vmatpush1.xpose.msra.mxu0 0.0
    %237 = vmatprep.subr.mxu0 0.0
    %238 = vmatpush1.xpose.msra.mxu0 0.0
    %239 = vmatprep.subr.mxu0 0.0
    %240 = vmatpush1.xpose.msra.mxu0 0.0
    %241 = vmatprep.subr.mxu0 0.0
    %242 = vmatpush1.xpose.msra.mxu0 0.0
    %243 = vmatprep.subr.mxu0 0.0
    %244 = vmatpush1.xpose.msra.mxu0 0.0
    %245 = vmatprep.subr.mxu0 0.0
    %246 = vmatpush1.xpose.msra.mxu0 0.0
    %247 = vmatprep.subr.mxu0 0.0
    %248 = vmatpush1.xpose.msra.mxu0 0.0
    %249 = vmatprep.subr.mxu0 0.0
    %250 = vmatpush1.xpose.msra.mxu0 0.0
    %251 = vmatprep.subr.mxu0 0.0
    %252 = vmatpush1.xpose.msra.mxu0 0.0
    %253 = vmatprep.subr.mxu0 0.0
    %254 = vmatpush1.xpose.msra.mxu0 0.0
    %255 = vmatprep.subr.mxu0 0.0
    %256 = vmatpush1.xpose.msra.mxu0 0.0
    %257 = vmatprep.subr.mxu0 0.0
    %258 = vmatpush1.xpose.msra.mxu0 0.0
    %259 = vmatprep.subr.mxu0 0.0
    %260 = vmatpush1.xpose.msra.mxu0 0.0
    %261 = vmatprep.subr.mxu0 0.0
    %262 = vmatpush1.xpose.msra.mxu0 0.0
    %263 = vmatprep.subr.mxu0 0.0
    %264 = vmatpush1.xpose.msra.mxu0 0.0
    %265 = vmatprep.subr.mxu0 0.0
    %266 = vmatpush1.xpose.msra.mxu0 0.0
    %267 = vmatprep.subr.mxu0 0.0
    %268 = vmatpush1.xpose.msra.mxu0 0.0
    %269 = vmatprep.subr.mxu0 0.0
    %270 = vmatpush1.xpose.msra.mxu0 0.0
    %271 = vmatprep.subr.mxu0 0.0
    %272 = vmatpush1.xpose.msra.mxu0 0.0
    %273 = vmatprep.subr.mxu0 0.0
    %274 = vmatpush1.xpose.msra.mxu0 0.0
    %275 = vmatprep.subr.mxu0 0.0
    %276 = vmatpush1.xpose.msra.mxu0 0.0
    %277 = vmatprep.subr.mxu0 0.0
    %278 = vmatpush1.xpose.msra.mxu0 0.0
    %279 = vmatprep.subr.mxu0 0.0
    %280 = vmatpush1.xpose.msra.mxu0 0.0
    %281 = vmatprep.subr.mxu0 0.0
    %282 = vmatpush1.xpose.msra.mxu0 0.0
    %283 = vmatprep.subr.mxu0 0.0
    %284 = vmatpush1.xpose.msra.mxu0 0.0
    %285 = vmatprep.mubr.f32.mxu0 0.0
    %286 = vmatmul.mubr.f32.gmra.mrb[0].mxu0 %v213
    %v287 = vpop.f32.mrb[0].mxu0
    %v288 = vadd.f32 0.0, %v287
    %v289 = vpop.f32.mrb[0].mxu0
    %290 = vmatprep.mubr.f32.mxu0 0.0
    %291 = vmatmul.mubr.f32.gmra.mrb[0].mxu0 %v215
    %v292 = vpop.f32.mrb[0].mxu0
    %v293 = vadd.f32 0.0, %v292
    %v294 = vpop.f32.mrb[0].mxu0
    %295 = vdwg.mxu0
    %v296 = vsel %vm204, %v288, -1e+30
    %v297 = vsel %vm205, %v293, -1e+30
    %vm298 = vcmask 130048
    %v299 = vsel %vm298, %v296, -inf
    %300 = vmax.xlane.f32.xlu0 %v299
    %v301 = vpop.xlane.xlu0 %300
    %v302 = vsel %vm298, %v297, -inf
    %303 = vmax.xlane.f32.xlu0 %v302
    %v304 = vpop.xlane.xlu0 %303
    %v305 = vsub.f32 %v296, %v301
    %v306 = vsub.f32 %v297, %v304
    %v307 = vmul.f32 %v305, 1.442695
    %v308 = vpow.pop %v307
    %v309 = vmul.f32 %v306, 1.442695
    %v310 = vpow.pop %v309
    %v311 = vsel %vm298, %v308, 0.0
    %312 = vadd.xlane.f32.xlu0 %v311
    %v313 = vpop.xlane.xlu0 %312
    %v314 = vsel %vm298, %v310, 0.0
    %315 = vadd.xlane.f32.xlu0 %v314
    %v316 = vpop.xlane.xlu0 %315
    %v317 = vrcp.pop %v313
    %v318 = vmul.f32 %v308, %v317
    %v319 = vrcp.pop %v316
    %v320 = vmul.f32 %v310, %v319
    %321 = vrot.lane.b32.xlu0 %v155, 64
    %v322 = vpop.permute.xlu0 %321
    %323 = vrot.lane.b32.xlu0 %v160, 64
    %v324 = vpop.permute.xlu0 %323
    %v328 = vsel %vm298, %v318, 0
    %v331 = vsel %vm298, %v320, 0
    %333 = vmatprep.subr.mxu0 0.0
    %334 = vmatpush1.msra.mxu0 %v322
    %335 = vmatprep.subr.mxu0 0.0
    %336 = vmatpush1.msra.mxu0 %v324
    %337 = vmatprep.subr.mxu0 0.0
    %338 = vmatpush1.msra.mxu0 0.0
    %339 = vmatprep.subr.mxu0 0.0
    %340 = vmatpush1.msra.mxu0 0.0
    %341 = vmatprep.subr.mxu0 0.0
    %342 = vmatpush1.msra.mxu0 0.0
    %343 = vmatprep.subr.mxu0 0.0
    %344 = vmatpush1.msra.mxu0 0.0
    %345 = vmatprep.subr.mxu0 0.0
    %346 = vmatpush1.msra.mxu0 0.0
    %347 = vmatprep.subr.mxu0 0.0
    %348 = vmatpush1.msra.mxu0 0.0
    %349 = vmatprep.subr.mxu0 0.0
    %350 = vmatpush1.msra.mxu0 0.0
    %351 = vmatprep.subr.mxu0 0.0
    %352 = vmatpush1.msra.mxu0 0.0
    %353 = vmatprep.subr.mxu0 0.0
    %354 = vmatpush1.msra.mxu0 0.0
    %355 = vmatprep.subr.mxu0 0.0
    %356 = vmatpush1.msra.mxu0 0.0
    %357 = vmatprep.subr.mxu0 0.0
    %358 = vmatpush1.msra.mxu0 0.0
    %359 = vmatprep.subr.mxu0 0.0
    %360 = vmatpush1.msra.mxu0 0.0
    %361 = vmatprep.subr.mxu0 0.0
    %362 = vmatpush1.msra.mxu0 0.0
    %363 = vmatprep.subr.mxu0 0.0
    %364 = vmatpush1.msra.mxu0 0.0
    %365 = vmatprep.subr.mxu0 0.0
    %366 = vmatpush1.msra.mxu0 0.0
    %367 = vmatprep.subr.mxu0 0.0
    %368 = vmatpush1.msra.mxu0 0.0
    %369 = vmatprep.subr.mxu0 0.0
    %370 = vmatpush1.msra.mxu0 0.0
    %371 = vmatprep.subr.mxu0 0.0
    %372 = vmatpush1.msra.mxu0 0.0
    %373 = vmatprep.subr.mxu0 0.0
    %374 = vmatpush1.msra.mxu0 0.0
    %375 = vmatprep.subr.mxu0 0.0
    %376 = vmatpush1.msra.mxu0 0.0
    %377 = vmatprep.subr.mxu0 0.0
    %378 = vmatpush1.msra.mxu0 0.0
    %379 = vmatprep.subr.mxu0 0.0
    %380 = vmatpush1.msra.mxu0 0.0
    %381 = vmatprep.subr.mxu0 0.0
    %382 = vmatpush1.msra.mxu0 0.0
    %383 = vmatprep.subr.mxu0 0.0
    %384 = vmatpush1.msra.mxu0 0.0
    %385 = vmatprep.subr.mxu0 0.0
    %386 = vmatpush1.msra.mxu0 0.0
    %387 = vmatprep.subr.mxu0 0.0
    %388 = vmatpush1.msra.mxu0 0.0
    %389 = vmatprep.subr.mxu0 0.0
    %390 = vmatpush1.msra.mxu0 0.0
    %391 = vmatprep.subr.mxu0 0.0
    %392 = vmatpush1.msra.mxu0 0.0
    %393 = vmatprep.subr.mxu0 0.0
    %394 = vmatpush1.msra.mxu0 0.0
    %395 = vmatprep.subr.mxu0 0.0
    %396 = vmatpush1.msra.mxu0 0.0
    %397 = vmatprep.mubr.f32.mxu0 0.0
    %398 = vmatmul.mubr.f32.gmra.mrb[0].mxu0 %v328
    %v399 = vpop.f32.mrb[0].mxu0
    %v400 = vadd.f32 0.0, %v399
    %v401 = vpop.f32.mrb[0].mxu0
    %402 = vmatprep.mubr.f32.mxu0 0.0
    %403 = vmatmul.mubr.f32.gmra.mrb[0].mxu0 %v331
    %v404 = vpop.f32.mrb[0].mxu0
    %v405 = vadd.f32 0.0, %v404
    %v406 = vpop.f32.mrb[0].mxu0
    %407 = vdwg.mxu0
    %408 = vrot.lane.b32.xlu0 %v155, 120
    %v409 = vpop.permute.xlu0 %408
    %410 = vrot.lane.b32.xlu0 %v160, 120
    %v411 = vpop.permute.xlu0 %410
    %412 = vrot.lane.b32.xlu0 %v155, 88
    %v413 = vpop.permute.xlu0 %412
    %414 = vrot.lane.b32.xlu0 %v160, 88
    %v415 = vpop.permute.xlu0 %414
    %v416 = vsel %vm212, %v409, 0
    %v418 = vsel %vm212, %v411, 0
    %v420 = vsel %vm212, %v413, 0
    %v422 = vsel %vm212, %v415, 0
    %424 = vmatprep.subr.mxu0 0.0
    %425 = vmatpush1.xpose.msra.mxu0 %v420
    %426 = vmatprep.subr.mxu0 0.0
    %427 = vmatpush1.xpose.msra.mxu0 %v422
    %428 = vmatprep.subr.mxu0 0.0
    %429 = vmatpush1.xpose.msra.mxu0 0.0
    %430 = vmatprep.subr.mxu0 0.0
    %431 = vmatpush1.xpose.msra.mxu0 0.0
    %432 = vmatprep.subr.mxu0 0.0
    %433 = vmatpush1.xpose.msra.mxu0 0.0
    %434 = vmatprep.subr.mxu0 0.0
    %435 = vmatpush1.xpose.msra.mxu0 0.0
    %436 = vmatprep.subr.mxu0 0.0
    %437 = vmatpush1.xpose.msra.mxu0 0.0
    %438 = vmatprep.subr.mxu0 0.0
    %439 = vmatpush1.xpose.msra.mxu0 0.0
    %440 = vmatprep.subr.mxu0 0.0
    %441 = vmatpush1.xpose.msra.mxu0 0.0
    %442 = vmatprep.subr.mxu0 0.0
    %443 = vmatpush1.xpose.msra.mxu0 0.0
    %444 = vmatprep.subr.mxu0 0.0
    %445 = vmatpush1.xpose.msra.mxu0 0.0
    %446 = vmatprep.subr.mxu0 0.0
    %447 = vmatpush1.xpose.msra.mxu0 0.0
    %448 = vmatprep.subr.mxu0 0.0
    %449 = vmatpush1.xpose.msra.mxu0 0.0
    %450 = vmatprep.subr.mxu0 0.0
    %451 = vmatpush1.xpose.msra.mxu0 0.0
    %452 = vmatprep.subr.mxu0 0.0
    %453 = vmatpush1.xpose.msra.mxu0 0.0
    %454 = vmatprep.subr.mxu0 0.0
    %455 = vmatpush1.xpose.msra.mxu0 0.0
    %456 = vmatprep.subr.mxu0 0.0
    %457 = vmatpush1.xpose.msra.mxu0 0.0
    %458 = vmatprep.subr.mxu0 0.0
    %459 = vmatpush1.xpose.msra.mxu0 0.0
    %460 = vmatprep.subr.mxu0 0.0
    %461 = vmatpush1.xpose.msra.mxu0 0.0
    %462 = vmatprep.subr.mxu0 0.0
    %463 = vmatpush1.xpose.msra.mxu0 0.0
    %464 = vmatprep.subr.mxu0 0.0
    %465 = vmatpush1.xpose.msra.mxu0 0.0
    %466 = vmatprep.subr.mxu0 0.0
    %467 = vmatpush1.xpose.msra.mxu0 0.0
    %468 = vmatprep.subr.mxu0 0.0
    %469 = vmatpush1.xpose.msra.mxu0 0.0
    %470 = vmatprep.subr.mxu0 0.0
    %471 = vmatpush1.xpose.msra.mxu0 0.0
    %472 = vmatprep.subr.mxu0 0.0
    %473 = vmatpush1.xpose.msra.mxu0 0.0
    %474 = vmatprep.subr.mxu0 0.0
    %475 = vmatpush1.xpose.msra.mxu0 0.0
    %476 = vmatprep.subr.mxu0 0.0
    %477 = vmatpush1.xpose.msra.mxu0 0.0
    %478 = vmatprep.subr.mxu0 0.0
    %479 = vmatpush1.xpose.msra.mxu0 0.0
    %480 = vmatprep.subr.mxu0 0.0
    %481 = vmatpush1.xpose.msra.mxu0 0.0
    %482 = vmatprep.subr.mxu0 0.0
    %483 = vmatpush1.xpose.msra.mxu0 0.0
    %484 = vmatprep.subr.mxu0 0.0
    %485 = vmatpush1.xpose.msra.mxu0 0.0
    %486 = vmatprep.subr.mxu0 0.0
    %487 = vmatpush1.xpose.msra.mxu0 0.0
    %488 = vmatprep.mubr.f32.mxu0 0.0
    %489 = vmatmul.mubr.f32.gmra.mrb[0].mxu0 %v416
    %v490 = vpop.f32.mrb[0].mxu0
    %v491 = vadd.f32 0.0, %v490
    %v492 = vpop.f32.mrb[0].mxu0
    %493 = vmatprep.mubr.f32.mxu0 0.0
    %494 = vmatmul.mubr.f32.gmra.mrb[0].mxu0 %v418
    %v495 = vpop.f32.mrb[0].mxu0
    %v496 = vadd.f32 0.0, %v495
    %v497 = vpop.f32.mrb[0].mxu0
    %498 = vdwg.mxu0
    %v499 = vsel %vm204, %v491, -1e+30
    %v500 = vsel %vm205, %v496, -1e+30
    %v501 = vsel %vm298, %v499, -inf
    %502 = vmax.xlane.f32.xlu0 %v501
    %v503 = vpop.xlane.xlu0 %502
    %v504 = vsel %vm298, %v500, -inf
    %505 = vmax.xlane.f32.xlu0 %v504
    %v506 = vpop.xlane.xlu0 %505
    %v507 = vsub.f32 %v499, %v503
    %v508 = vsub.f32 %v500, %v506
    %v509 = vmul.f32 %v507, 1.442695
    %v510 = vpow.pop %v509
    %v511 = vmul.f32 %v508, 1.442695
    %v512 = vpow.pop %v511
    %v513 = vsel %vm298, %v510, 0.0
    %514 = vadd.xlane.f32.xlu0 %v513
    %v515 = vpop.xlane.xlu0 %514
    %v516 = vsel %vm298, %v512, 0.0
    %517 = vadd.xlane.f32.xlu0 %v516
    %v518 = vpop.xlane.xlu0 %517
    %v519 = vrcp.pop %v515
    %v520 = vmul.f32 %v510, %v519
    %v521 = vrcp.pop %v518
    %v522 = vmul.f32 %v512, %v521
    %523 = vrot.lane.b32.xlu0 %v155, 56
    %v524 = vpop.permute.xlu0 %523
    %525 = vrot.lane.b32.xlu0 %v160, 56
    %v526 = vpop.permute.xlu0 %525
    %v530 = vsel %vm298, %v520, 0
    %v533 = vsel %vm298, %v522, 0
    %535 = vmatprep.subr.mxu0 0.0
    %536 = vmatpush1.msra.mxu0 %v524
    %537 = vmatprep.subr.mxu0 0.0
    %538 = vmatpush1.msra.mxu0 %v526
    %539 = vmatprep.subr.mxu0 0.0
    %540 = vmatpush1.msra.mxu0 0.0
    %541 = vmatprep.subr.mxu0 0.0
    %542 = vmatpush1.msra.mxu0 0.0
    %543 = vmatprep.subr.mxu0 0.0
    %544 = vmatpush1.msra.mxu0 0.0
    %545 = vmatprep.subr.mxu0 0.0
    %546 = vmatpush1.msra.mxu0 0.0
    %547 = vmatprep.subr.mxu0 0.0
    %548 = vmatpush1.msra.mxu0 0.0
    %549 = vmatprep.subr.mxu0 0.0
    %550 = vmatpush1.msra.mxu0 0.0
    %551 = vmatprep.subr.mxu0 0.0
    %552 = vmatpush1.msra.mxu0 0.0
    %553 = vmatprep.subr.mxu0 0.0
    %554 = vmatpush1.msra.mxu0 0.0
    %555 = vmatprep.subr.mxu0 0.0
    %556 = vmatpush1.msra.mxu0 0.0
    %557 = vmatprep.subr.mxu0 0.0
    %558 = vmatpush1.msra.mxu0 0.0
    %559 = vmatprep.subr.mxu0 0.0
    %560 = vmatpush1.msra.mxu0 0.0
    %561 = vmatprep.subr.mxu0 0.0
    %562 = vmatpush1.msra.mxu0 0.0
    %563 = vmatprep.subr.mxu0 0.0
    %564 = vmatpush1.msra.mxu0 0.0
    %565 = vmatprep.subr.mxu0 0.0
    %566 = vmatpush1.msra.mxu0 0.0
    %567 = vmatprep.subr.mxu0 0.0
    %568 = vmatpush1.msra.mxu0 0.0
    %569 = vmatprep.subr.mxu0 0.0
    %570 = vmatpush1.msra.mxu0 0.0
    %571 = vmatprep.subr.mxu0 0.0
    %572 = vmatpush1.msra.mxu0 0.0
    %573 = vmatprep.subr.mxu0 0.0
    %574 = vmatpush1.msra.mxu0 0.0
    %575 = vmatprep.subr.mxu0 0.0
    %576 = vmatpush1.msra.mxu0 0.0
    %577 = vmatprep.subr.mxu0 0.0
    %578 = vmatpush1.msra.mxu0 0.0
    %579 = vmatprep.subr.mxu0 0.0
    %580 = vmatpush1.msra.mxu0 0.0
    %581 = vmatprep.subr.mxu0 0.0
    %582 = vmatpush1.msra.mxu0 0.0
    %583 = vmatprep.subr.mxu0 0.0
    %584 = vmatpush1.msra.mxu0 0.0
    %585 = vmatprep.subr.mxu0 0.0
    %586 = vmatpush1.msra.mxu0 0.0
    %587 = vmatprep.subr.mxu0 0.0
    %588 = vmatpush1.msra.mxu0 0.0
    %589 = vmatprep.subr.mxu0 0.0
    %590 = vmatpush1.msra.mxu0 0.0
    %591 = vmatprep.subr.mxu0 0.0
    %592 = vmatpush1.msra.mxu0 0.0
    %593 = vmatprep.subr.mxu0 0.0
    %594 = vmatpush1.msra.mxu0 0.0
    %595 = vmatprep.subr.mxu0 0.0
    %596 = vmatpush1.msra.mxu0 0.0
    %597 = vmatprep.subr.mxu0 0.0
    %598 = vmatpush1.msra.mxu0 0.0
    %599 = vmatprep.mubr.f32.mxu0 0.0
    %600 = vmatmul.mubr.f32.gmra.mrb[0].mxu0 %v530
    %v601 = vpop.f32.mrb[0].mxu0
    %v602 = vadd.f32 0.0, %v601
    %v603 = vpop.f32.mrb[0].mxu0
    %604 = vmatprep.mubr.f32.mxu0 0.0
    %605 = vmatmul.mubr.f32.gmra.mrb[0].mxu0 %v533
    %v606 = vpop.f32.mrb[0].mxu0
    %v607 = vadd.f32 0.0, %v606
    %v608 = vpop.f32.mrb[0].mxu0
    %609 = vdwg.mxu0
    %610 = vrot.lane.b32.xlu0 %v155, 112
    %v611 = vpop.permute.xlu0 %610
    %612 = vrot.lane.b32.xlu0 %v160, 112
    %v613 = vpop.permute.xlu0 %612
    %614 = vrot.lane.b32.xlu0 %v155, 80
    %v615 = vpop.permute.xlu0 %614
    %616 = vrot.lane.b32.xlu0 %v160, 80
    %v617 = vpop.permute.xlu0 %616
    %v618 = vsel %vm212, %v611, 0
    %v620 = vsel %vm212, %v613, 0
    %v622 = vsel %vm212, %v615, 0
    %v624 = vsel %vm212, %v617, 0
    %626 = vmatprep.subr.mxu0 0.0
    %627 = vmatpush1.xpose.msra.mxu0 %v622
    %628 = vmatprep.subr.mxu0 0.0
    %629 = vmatpush1.xpose.msra.mxu0 %v624
    %630 = vmatprep.subr.mxu0 0.0
    %631 = vmatpush1.xpose.msra.mxu0 0.0
    %632 = vmatprep.subr.mxu0 0.0
    %633 = vmatpush1.xpose.msra.mxu0 0.0
    %634 = vmatprep.subr.mxu0 0.0
    %635 = vmatpush1.xpose.msra.mxu0 0.0
    %636 = vmatprep.subr.mxu0 0.0
    %637 = vmatpush1.xpose.msra.mxu0 0.0
    %638 = vmatprep.subr.mxu0 0.0
    %639 = vmatpush1.xpose.msra.mxu0 0.0
    %640 = vmatprep.subr.mxu0 0.0
    %641 = vmatpush1.xpose.msra.mxu0 0.0
    %642 = vmatprep.subr.mxu0 0.0
    %643 = vmatpush1.xpose.msra.mxu0 0.0
    %644 = vmatprep.subr.mxu0 0.0
    %645 = vmatpush1.xpose.msra.mxu0 0.0
    %646 = vmatprep.subr.mxu0 0.0
    %647 = vmatpush1.xpose.msra.mxu0 0.0
    %648 = vmatprep.subr.mxu0 0.0
    %649 = vmatpush1.xpose.msra.mxu0 0.0
    %650 = vmatprep.subr.mxu0 0.0
    %651 = vmatpush1.xpose.msra.mxu0 0.0
    %652 = vmatprep.subr.mxu0 0.0
    %653 = vmatpush1.xpose.msra.mxu0 0.0
    %654 = vmatprep.subr.mxu0 0.0
    %655 = vmatpush1.xpose.msra.mxu0 0.0
    %656 = vmatprep.subr.mxu0 0.0
    %657 = vmatpush1.xpose.msra.mxu0 0.0
    %658 = vmatprep.subr.mxu0 0.0
    %659 = vmatpush1.xpose.msra.mxu0 0.0
    %660 = vmatprep.subr.mxu0 0.0
    %661 = vmatpush1.xpose.msra.mxu0 0.0
    %662 = vmatprep.subr.mxu0 0.0
    %663 = vmatpush1.xpose.msra.mxu0 0.0
    %664 = vmatprep.subr.mxu0 0.0
    %665 = vmatpush1.xpose.msra.mxu0 0.0
    %666 = vmatprep.subr.mxu0 0.0
    %667 = vmatpush1.xpose.msra.mxu0 0.0
    %668 = vmatprep.subr.mxu0 0.0
    %669 = vmatpush1.xpose.msra.mxu0 0.0
    %670 = vmatprep.subr.mxu0 0.0
    %671 = vmatpush1.xpose.msra.mxu0 0.0
    %672 = vmatprep.subr.mxu0 0.0
    %673 = vmatpush1.xpose.msra.mxu0 0.0
    %674 = vmatprep.subr.mxu0 0.0
    %675 = vmatpush1.xpose.msra.mxu0 0.0
    %676 = vmatprep.subr.mxu0 0.0
    %677 = vmatpush1.xpose.msra.mxu0 0.0
    %678 = vmatprep.subr.mxu0 0.0
    %679 = vmatpush1.xpose.msra.mxu0 0.0
    %680 = vmatprep.subr.mxu0 0.0
    %681 = vmatpush1.xpose.msra.mxu0 0.0
    %682 = vmatprep.subr.mxu0 0.0
    %683 = vmatpush1.xpose.msra.mxu0 0.0
    %684 = vmatprep.subr.mxu0 0.0
    %685 = vmatpush1.xpose.msra.mxu0 0.0
    %686 = vmatprep.subr.mxu0 0.0
    %687 = vmatpush1.xpose.msra.mxu0 0.0
    %688 = vmatprep.subr.mxu0 0.0
    %689 = vmatpush1.xpose.msra.mxu0 0.0
    %690 = vmatprep.mubr.f32.mxu0 0.0
    %691 = vmatmul.mubr.f32.gmra.mrb[0].mxu0 %v618
    %v692 = vpop.f32.mrb[0].mxu0
    %v693 = vadd.f32 0.0, %v692
    %v694 = vpop.f32.mrb[0].mxu0
    %695 = vmatprep.mubr.f32.mxu0 0.0
    %696 = vmatmul.mubr.f32.gmra.mrb[0].mxu0 %v620
    %v697 = vpop.f32.mrb[0].mxu0
    %v698 = vadd.f32 0.0, %v697
    %v699 = vpop.f32.mrb[0].mxu0
    %700 = vdwg.mxu0
    %v701 = vsel %vm204, %v693, -1e+30
    %v702 = vsel %vm205, %v698, -1e+30
    %v703 = vsel %vm298, %v701, -inf
    %704 = vmax.xlane.f32.xlu0 %v703
    %v705 = vpop.xlane.xlu0 %704
    %v706 = vsel %vm298, %v702, -inf
    %707 = vmax.xlane.f32.xlu0 %v706
    %v708 = vpop.xlane.xlu0 %707
    %v709 = vsub.f32 %v701, %v705
    %v710 = vsub.f32 %v702, %v708
    %v711 = vmul.f32 %v709, 1.442695
    %v712 = vpow.pop %v711
    %v713 = vmul.f32 %v710, 1.442695
    %v714 = vpow.pop %v713
    %v715 = vsel %vm298, %v712, 0.0
    %716 = vadd.xlane.f32.xlu0 %v715
    %v717 = vpop.xlane.xlu0 %716
    %v718 = vsel %vm298, %v714, 0.0
    %719 = vadd.xlane.f32.xlu0 %v718
    %v720 = vpop.xlane.xlu0 %719
    %v721 = vrcp.pop %v717
    %v722 = vmul.f32 %v712, %v721
    %v723 = vrcp.pop %v720
    %v724 = vmul.f32 %v714, %v723
    %725 = vrot.lane.b32.xlu0 %v155, 48
    %v726 = vpop.permute.xlu0 %725
    %727 = vrot.lane.b32.xlu0 %v160, 48
    %v728 = vpop.permute.xlu0 %727
    %v732 = vsel %vm298, %v722, 0
    %v735 = vsel %vm298, %v724, 0
    %737 = vmatprep.subr.mxu0 0.0
    %738 = vmatpush1.msra.mxu0 %v726
    %739 = vmatprep.subr.mxu0 0.0
    %740 = vmatpush1.msra.mxu0 %v728
    %741 = vmatprep.subr.mxu0 0.0
    %742 = vmatpush1.msra.mxu0 0.0
    %743 = vmatprep.subr.mxu0 0.0
    %744 = vmatpush1.msra.mxu0 0.0
    %745 = vmatprep.subr.mxu0 0.0
    %746 = vmatpush1.msra.mxu0 0.0
    %747 = vmatprep.subr.mxu0 0.0
    %748 = vmatpush1.msra.mxu0 0.0
    %749 = vmatprep.subr.mxu0 0.0
    %750 = vmatpush1.msra.mxu0 0.0
    %751 = vmatprep.subr.mxu0 0.0
    %752 = vmatpush1.msra.mxu0 0.0
    %753 = vmatprep.subr.mxu0 0.0
    %754 = vmatpush1.msra.mxu0 0.0
    %755 = vmatprep.subr.mxu0 0.0
    %756 = vmatpush1.msra.mxu0 0.0
    %757 = vmatprep.subr.mxu0 0.0
    %758 = vmatpush1.msra.mxu0 0.0
    %759 = vmatprep.subr.mxu0 0.0
    %760 = vmatpush1.msra.mxu0 0.0
    %761 = vmatprep.subr.mxu0 0.0
    %762 = vmatpush1.msra.mxu0 0.0
    %763 = vmatprep.subr.mxu0 0.0
    %764 = vmatpush1.msra.mxu0 0.0
    %765 = vmatprep.subr.mxu0 0.0
    %766 = vmatpush1.msra.mxu0 0.0
    %767 = vmatprep.subr.mxu0 0.0
    %768 = vmatpush1.msra.mxu0 0.0
    %769 = vmatprep.subr.mxu0 0.0
    %770 = vmatpush1.msra.mxu0 0.0
    %771 = vmatprep.subr.mxu0 0.0
    %772 = vmatpush1.msra.mxu0 0.0
    %773 = vmatprep.subr.mxu0 0.0
    %774 = vmatpush1.msra.mxu0 0.0
    %775 = vmatprep.subr.mxu0 0.0
    %776 = vmatpush1.msra.mxu0 0.0
    %777 = vmatprep.subr.mxu0 0.0
    %778 = vmatpush1.msra.mxu0 0.0
    %779 = vmatprep.subr.mxu0 0.0
    %780 = vmatpush1.msra.mxu0 0.0
    %781 = vmatprep.subr.mxu0 0.0
    %782 = vmatpush1.msra.mxu0 0.0
    %783 = vmatprep.subr.mxu0 0.0
    %784 = vmatpush1.msra.mxu0 0.0
    %785 = vmatprep.subr.mxu0 0.0
    %786 = vmatpush1.msra.mxu0 0.0
    %787 = vmatprep.subr.mxu0 0.0
    %788 = vmatpush1.msra.mxu0 0.0
    %789 = vmatprep.subr.mxu0 0.0
    %790 = vmatpush1.msra.mxu0 0.0
    %791 = vmatprep.subr.mxu0 0.0
    %792 = vmatpush1.msra.mxu0 0.0
    %793 = vmatprep.subr.mxu0 0.0
    %794 = vmatpush1.msra.mxu0 0.0
    %795 = vmatprep.subr.mxu0 0.0
    %796 = vmatpush1.msra.mxu0 0.0
    %797 = vmatprep.subr.mxu0 0.0
    %798 = vmatpush1.msra.mxu0 0.0
    %799 = vmatprep.subr.mxu0 0.0
    %800 = vmatpush1.msra.mxu0 0.0
    %801 = vmatprep.mubr.f32.mxu0 0.0
    %802 = vmatmul.mubr.f32.gmra.mrb[0].mxu0 %v732
    %v803 = vpop.f32.mrb[0].mxu0
    %v804 = vadd.f32 0.0, %v803
    %v805 = vpop.f32.mrb[0].mxu0
    %806 = vmatprep.mubr.f32.mxu0 0.0
    %807 = vmatmul.mubr.f32.gmra.mrb[0].mxu0 %v735
    %v808 = vpop.f32.mrb[0].mxu0
    %v809 = vadd.f32 0.0, %v808
    %v810 = vpop.f32.mrb[0].mxu0
    %811 = vdwg.mxu0
    %812 = vrot.lane.b32.xlu0 %v155, 104
    %v813 = vpop.permute.xlu0 %812
    %814 = vrot.lane.b32.xlu0 %v160, 104
    %v815 = vpop.permute.xlu0 %814
    %816 = vrot.lane.b32.xlu0 %v155, 72
    %v817 = vpop.permute.xlu0 %816
    %818 = vrot.lane.b32.xlu0 %v160, 72
    %v819 = vpop.permute.xlu0 %818
    %v820 = vsel %vm212, %v813, 0
    %v822 = vsel %vm212, %v815, 0
    %v824 = vsel %vm212, %v817, 0
    %v826 = vsel %vm212, %v819, 0
    %828 = vmatprep.subr.mxu0 0.0
    %829 = vmatpush1.xpose.msra.mxu0 %v824
    %830 = vmatprep.subr.mxu0 0.0
    %831 = vmatpush1.xpose.msra.mxu0 %v826
    %832 = vmatprep.subr.mxu0 0.0
    %833 = vmatpush1.xpose.msra.mxu0 0.0
    %834 = vmatprep.subr.mxu0 0.0
    %835 = vmatpush1.xpose.msra.mxu0 0.0
    %836 = vmatprep.subr.mxu0 0.0
    %837 = vmatpush1.xpose.msra.mxu0 0.0
    %838 = vmatprep.subr.mxu0 0.0
    %839 = vmatpush1.xpose.msra.mxu0 0.0
    %840 = vmatprep.subr.mxu0 0.0
    %841 = vmatpush1.xpose.msra.mxu0 0.0
    %842 = vmatprep.subr.mxu0 0.0
    %843 = vmatpush1.xpose.msra.mxu0 0.0
    %844 = vmatprep.subr.mxu0 0.0
    %845 = vmatpush1.xpose.msra.mxu0 0.0
    %846 = vmatprep.subr.mxu0 0.0
    %847 = vmatpush1.xpose.msra.mxu0 0.0
    %848 = vmatprep.subr.mxu0 0.0
    %849 = vmatpush1.xpose.msra.mxu0 0.0
    %850 = vmatprep.subr.mxu0 0.0
    %851 = vmatpush1.xpose.msra.mxu0 0.0
    %852 = vmatprep.subr.mxu0 0.0
    %853 = vmatpush1.xpose.msra.mxu0 0.0
    %854 = vmatprep.subr.mxu0 0.0
    %855 = vmatpush1.xpose.msra.mxu0 0.0
    %856 = vmatprep.subr.mxu0 0.0
    %857 = vmatpush1.xpose.msra.mxu0 0.0
    %858 = vmatprep.subr.mxu0 0.0
    %859 = vmatpush1.xpose.msra.mxu0 0.0
    %860 = vmatprep.subr.mxu0 0.0
    %861 = vmatpush1.xpose.msra.mxu0 0.0
    %862 = vmatprep.subr.mxu0 0.0
    %863 = vmatpush1.xpose.msra.mxu0 0.0
    %864 = vmatprep.subr.mxu0 0.0
    %865 = vmatpush1.xpose.msra.mxu0 0.0
    %866 = vmatprep.subr.mxu0 0.0
    %867 = vmatpush1.xpose.msra.mxu0 0.0
    %868 = vmatprep.subr.mxu0 0.0
    %869 = vmatpush1.xpose.msra.mxu0 0.0
    %870 = vmatprep.subr.mxu0 0.0
    %871 = vmatpush1.xpose.msra.mxu0 0.0
    %872 = vmatprep.subr.mxu0 0.0
    %873 = vmatpush1.xpose.msra.mxu0 0.0
    %874 = vmatprep.subr.mxu0 0.0
    %875 = vmatpush1.xpose.msra.mxu0 0.0
    %876 = vmatprep.subr.mxu0 0.0
    %877 = vmatpush1.xpose.msra.mxu0 0.0
    %878 = vmatprep.subr.mxu0 0.0
    %879 = vmatpush1.xpose.msra.mxu0 0.0
    %880 = vmatprep.subr.mxu0 0.0
    %881 = vmatpush1.xpose.msra.mxu0 0.0
    %882 = vmatprep.subr.mxu0 0.0
    %883 = vmatpush1.xpose.msra.mxu0 0.0
    %884 = vmatprep.subr.mxu0 0.0
    %885 = vmatpush1.xpose.msra.mxu0 0.0
    %886 = vmatprep.subr.mxu0 0.0
    %887 = vmatpush1.xpose.msra.mxu0 0.0
    %888 = vmatprep.subr.mxu0 0.0
    %889 = vmatpush1.xpose.msra.mxu0 0.0
    %890 = vmatprep.subr.mxu0 0.0
    %891 = vmatpush1.xpose.msra.mxu0 0.0
    %892 = vmatprep.mubr.f32.mxu0 0.0
    %893 = vmatmul.mubr.f32.gmra.mrb[0].mxu0 %v820
    %v894 = vpop.f32.mrb[0].mxu0
    %v895 = vadd.f32 0.0, %v894
    %v896 = vpop.f32.mrb[0].mxu0
    %897 = vmatprep.mubr.f32.mxu0 0.0
    %898 = vmatmul.mubr.f32.gmra.mrb[0].mxu0 %v822
    %v899 = vpop.f32.mrb[0].mxu0
    %v900 = vadd.f32 0.0, %v899
    %v901 = vpop.f32.mrb[0].mxu0
    %902 = vdwg.mxu0
    %v903 = vsel %vm204, %v895, -1e+30
    %v904 = vsel %vm205, %v900, -1e+30
    %v905 = vsel %vm298, %v903, -inf
    %906 = vmax.xlane.f32.xlu0 %v905
    %v907 = vpop.xlane.xlu0 %906
    %v908 = vsel %vm298, %v904, -inf
    %909 = vmax.xlane.f32.xlu0 %v908
    %v910 = vpop.xlane.xlu0 %909
    %v911 = vsub.f32 %v903, %v907
    %v912 = vsub.f32 %v904, %v910
    %v913 = vmul.f32 %v911, 1.442695
    %v914 = vpow.pop %v913
    %v915 = vmul.f32 %v912, 1.442695
    %v916 = vpow.pop %v915
    %v917 = vsel %vm298, %v914, 0.0
    %918 = vadd.xlane.f32.xlu0 %v917
    %v919 = vpop.xlane.xlu0 %918
    %v920 = vsel %vm298, %v916, 0.0
    %921 = vadd.xlane.f32.xlu0 %v920
    %v922 = vpop.xlane.xlu0 %921
    %v923 = vrcp.pop %v919
    %v924 = vmul.f32 %v914, %v923
    %v925 = vrcp.pop %v922
    %v926 = vmul.f32 %v916, %v925
    %927 = vrot.lane.b32.xlu0 %v155, 40
    %v928 = vpop.permute.xlu0 %927
    %929 = vrot.lane.b32.xlu0 %v160, 40
    %v930 = vpop.permute.xlu0 %929
    %v934 = vsel %vm298, %v924, 0
    %v937 = vsel %vm298, %v926, 0
    %939 = vmatprep.subr.mxu0 0.0
    %940 = vmatpush1.msra.mxu0 %v928
    %941 = vmatprep.subr.mxu0 0.0
    %942 = vmatpush1.msra.mxu0 %v930
    %943 = vmatprep.subr.mxu0 0.0
    %944 = vmatpush1.msra.mxu0 0.0
    %945 = vmatprep.subr.mxu0 0.0
    %946 = vmatpush1.msra.mxu0 0.0
    %947 = vmatprep.subr.mxu0 0.0
    %948 = vmatpush1.msra.mxu0 0.0
    %949 = vmatprep.subr.mxu0 0.0
    %950 = vmatpush1.msra.mxu0 0.0
    %951 = vmatprep.subr.mxu0 0.0
    %952 = vmatpush1.msra.mxu0 0.0
    %953 = vmatprep.subr.mxu0 0.0
    %954 = vmatpush1.msra.mxu0 0.0
    %955 = vmatprep.subr.mxu0 0.0
    %956 = vmatpush1.msra.mxu0 0.0
    %957 = vmatprep.subr.mxu0 0.0
    %958 = vmatpush1.msra.mxu0 0.0
    %959 = vmatprep.subr.mxu0 0.0
    %960 = vmatpush1.msra.mxu0 0.0
    %961 = vmatprep.subr.mxu0 0.0
    %962 = vmatpush1.msra.mxu0 0.0
    %963 = vmatprep.subr.mxu0 0.0
    %964 = vmatpush1.msra.mxu0 0.0
    %965 = vmatprep.subr.mxu0 0.0
    %966 = vmatpush1.msra.mxu0 0.0
    %967 = vmatprep.subr.mxu0 0.0
    %968 = vmatpush1.msra.mxu0 0.0
    %969 = vmatprep.subr.mxu0 0.0
    %970 = vmatpush1.msra.mxu0 0.0
    %971 = vmatprep.subr.mxu0 0.0
    %972 = vmatpush1.msra.mxu0 0.0
    %973 = vmatprep.subr.mxu0 0.0
    %974 = vmatpush1.msra.mxu0 0.0
    %975 = vmatprep.subr.mxu0 0.0
    %976 = vmatpush1.msra.mxu0 0.0
    %977 = vmatprep.subr.mxu0 0.0
    %978 = vmatpush1.msra.mxu0 0.0
    %979 = vmatprep.subr.mxu0 0.0
    %980 = vmatpush1.msra.mxu0 0.0
    %981 = vmatprep.subr.mxu0 0.0
    %982 = vmatpush1.msra.mxu0 0.0
    %983 = vmatprep.subr.mxu0 0.0
    %984 = vmatpush1.msra.mxu0 0.0
    %985 = vmatprep.subr.mxu0 0.0
    %986 = vmatpush1.msra.mxu0 0.0
    %987 = vmatprep.subr.mxu0 0.0
    %988 = vmatpush1.msra.mxu0 0.0
    %989 = vmatprep.subr.mxu0 0.0
    %990 = vmatpush1.msra.mxu0 0.0
    %991 = vmatprep.subr.mxu0 0.0
    %992 = vmatpush1.msra.mxu0 0.0
    %993 = vmatprep.subr.mxu0 0.0
    %994 = vmatpush1.msra.mxu0 0.0
    %995 = vmatprep.subr.mxu0 0.0
    %996 = vmatpush1.msra.mxu0 0.0
    %997 = vmatprep.subr.mxu0 0.0
    %998 = vmatpush1.msra.mxu0 0.0
    %999 = vmatprep.subr.mxu0 0.0
    %1000 = vmatpush1.msra.mxu0 0.0
    %1001 = vmatprep.subr.mxu0 0.0
    %1002 = vmatpush1.msra.mxu0 0.0
    %1003 = vmatprep.mubr.f32.mxu0 0.0
    %1004 = vmatmul.mubr.f32.gmra.mrb[0].mxu0 %v934
    %v1005 = vpop.f32.mrb[0].mxu0
    %v1006 = vadd.f32 0.0, %v1005
    %v1007 = vpop.f32.mrb[0].mxu0
    %1008 = vmatprep.mubr.f32.mxu0 0.0
    %1009 = vmatmul.mubr.f32.gmra.mrb[0].mxu0 %v937
    %v1010 = vpop.f32.mrb[0].mxu0
    %v1011 = vadd.f32 0.0, %v1010
    %v1012 = vpop.f32.mrb[0].mxu0
    %1013 = vdwg.mxu0
    %1016 = vrot.lane.b32.xlu0 %v602, 8
    %v1017 = vpop.permute.xlu0 %1016
    %1018 = vrot.lane.b32.xlu0 %v607, 8
    %v1019 = vpop.permute.xlu0 %1018
    %1024 = vrot.lane.b32.xlu0 %v804, 16
    %v1025 = vpop.permute.xlu0 %1024
    %1026 = vrot.lane.b32.xlu0 %v809, 16
    %v1027 = vpop.permute.xlu0 %1026
    %1032 = vrot.lane.b32.xlu0 %v1006, 24
    %v1033 = vpop.permute.xlu0 %1032
    %1034 = vrot.lane.b32.xlu0 %v1011, 24
    %v1035 = vpop.permute.xlu0 %1034
    %v1038 = vsel %vm212, %v400, %v1017
    %v1039 = vsel %vm212, %v405, %v1019
    %v1040 = vsel %vm298, %v1038, %v1025
    %v1041 = vsel %vm298, %v1039, %v1027
    %vm1042 = vcmask 195584
    %v1043 = vsel %vm1042, %v1040, %v1033
    %v1044 = vsel %vm1042, %v1041, %v1035
    %v1045 = vld [vmem:[%s3] sm:$0xff]
    %v1046 = vld [vmem:[%s3 + $0x8] sm:$0xff]
    %v1047 = vld [vmem:[%s3 + $0x10] sm:$0xff]
    %v1048 = vld [vmem:[%s3 + $0x18] sm:$0xff]
    %v1049 = vlaneseq
    %v1050 = vshrl.u32 %v1049, 7
    %v1051 = vsub.s32 0, %v1050
    %v1052 = vrot.slane %v31, %v1051
    %v1054 = vsel %vm34, %v1043, 0
    %v1057 = vsel %vm34, %v1044, 0
    %1059 = vmatprep.subr.mxu0 0.0
    %1060 = vmatpush1.msra.mxu0 %v1045
    %1061 = vmatprep.subr.mxu0 0.0
    %1062 = vmatpush1.msra.mxu0 %v1046
    %1063 = vmatprep.subr.mxu0 0.0
    %1064 = vmatpush1.msra.mxu0 %v1047
    %1065 = vmatprep.subr.mxu0 0.0
    %1066 = vmatpush1.msra.mxu0 %v1048
    %1067 = vmatprep.subr.mxu0 0.0
    %1068 = vmatpush1.msra.mxu0 0.0
    %1069 = vmatprep.subr.mxu0 0.0
    %1070 = vmatpush1.msra.mxu0 0.0
    %1071 = vmatprep.subr.mxu0 0.0
    %1072 = vmatpush1.msra.mxu0 0.0
    %1073 = vmatprep.subr.mxu0 0.0
    %1074 = vmatpush1.msra.mxu0 0.0
    %1075 = vmatprep.subr.mxu0 0.0
    %1076 = vmatpush1.msra.mxu0 0.0
    %1077 = vmatprep.subr.mxu0 0.0
    %1078 = vmatpush1.msra.mxu0 0.0
    %1079 = vmatprep.subr.mxu0 0.0
    %1080 = vmatpush1.msra.mxu0 0.0
    %1081 = vmatprep.subr.mxu0 0.0
    %1082 = vmatpush1.msra.mxu0 0.0
    %1083 = vmatprep.subr.mxu0 0.0
    %1084 = vmatpush1.msra.mxu0 0.0
    %1085 = vmatprep.subr.mxu0 0.0
    %1086 = vmatpush1.msra.mxu0 0.0
    %1087 = vmatprep.subr.mxu0 0.0
    %1088 = vmatpush1.msra.mxu0 0.0
    %1089 = vmatprep.subr.mxu0 0.0
    %1090 = vmatpush1.msra.mxu0 0.0
    %1091 = vmatprep.subr.mxu0 0.0
    %1092 = vmatpush1.msra.mxu0 0.0
    %1093 = vmatprep.subr.mxu0 0.0
    %1094 = vmatpush1.msra.mxu0 0.0
    %1095 = vmatprep.subr.mxu0 0.0
    %1096 = vmatpush1.msra.mxu0 0.0
    %1097 = vmatprep.subr.mxu0 0.0
    %1098 = vmatpush1.msra.mxu0 0.0
    %1099 = vmatprep.subr.mxu0 0.0
    %1100 = vmatpush1.msra.mxu0 0.0
    %1101 = vmatprep.subr.mxu0 0.0
    %1102 = vmatpush1.msra.mxu0 0.0
    %1103 = vmatprep.subr.mxu0 0.0
    %1104 = vmatpush1.msra.mxu0 0.0
    %1105 = vmatprep.subr.mxu0 0.0
    %1106 = vmatpush1.msra.mxu0 0.0
    %1107 = vmatprep.subr.mxu0 0.0
    %1108 = vmatpush1.msra.mxu0 0.0
    %1109 = vmatprep.subr.mxu0 0.0
    %1110 = vmatpush1.msra.mxu0 0.0
    %1111 = vmatprep.subr.mxu0 0.0
    %1112 = vmatpush1.msra.mxu0 0.0
    %1113 = vmatprep.subr.mxu0 0.0
    %1114 = vmatpush1.msra.mxu0 0.0
    %1115 = vmatprep.subr.mxu0 0.0
    %1116 = vmatpush1.msra.mxu0 0.0
    %1117 = vmatprep.subr.mxu0 0.0
    %1118 = vmatpush1.msra.mxu0 0.0
    %1119 = vmatprep.subr.mxu0 0.0
    %1120 = vmatpush1.msra.mxu0 0.0
    %1121 = vmatprep.subr.mxu0 0.0
    %1122 = vmatpush1.msra.mxu0 0.0
    %1123 = vmatprep.mubr.f32.mxu0 0.0
    %1124 = vmatmul.mubr.f32.gmra.mrb[0].mxu0 %v1054
    %v1125 = vpop.f32.mrb[0].mxu0
    %v1126 = vadd.f32 %v1052, %v1125
    %v1127 = vpop.f32.mrb[0].mxu0
    %1128 = vmatprep.mubr.f32.mxu0 0.0
    %1129 = vmatmul.mubr.f32.gmra.mrb[0].mxu0 %v1057
    %v1130 = vpop.f32.mrb[0].mxu0
    %v1131 = vadd.f32 %v1052, %v1130
    %v1132 = vpop.f32.mrb[0].mxu0
    %1133 = vdwg.mxu0
    %v1134 = vadd.f32 %v24, %v1126
    %v1135 = vadd.f32 %v25, %v1131
    %v1136 = vsel %vm34, %v1134, 0.0
    %1137 = vadd.xlane.f32.xlu0 %v1136
    %v1138 = vpop.xlane.xlu0 %1137
    %v1139 = vsel %vm34, %v1135, 0.0
    %1140 = vadd.xlane.f32.xlu0 %v1139
    %v1141 = vpop.xlane.xlu0 %1140
    %v1142 = vmul.f32 %v1138, %v41
    %v1143 = vmul.f32 %v1141, %v41
    %v1144 = vsub.f32 %v1134, %v1142
    %v1145 = vsub.f32 %v1135, %v1143
    %v1146 = vmul.f32 %v1144, %v1144
    %v1147 = vmul.f32 %v1145, %v1145
    %v1148 = vsel %vm34, %v1146, 0.0
    %1149 = vadd.xlane.f32.xlu0 %v1148
    %v1150 = vpop.xlane.xlu0 %1149
    %v1151 = vsel %vm34, %v1147, 0.0
    %1152 = vadd.xlane.f32.xlu0 %v1151
    %v1153 = vpop.xlane.xlu0 %1152
    %v1154 = vmul.f32 %v1150, %v41
    %v1155 = vmul.f32 %v1153, %v41
    %v1156 = vadd.f32 %v1154, 1e-05
    %v1157 = vadd.f32 %v1155, 1e-05
    %v1158 = vrsqrt.pop %v1156
    %v1159 = vrsqrt.pop %v1157
    %v1160 = vmul.f32 %v1144, %v1158
    %v1161 = vmul.f32 %v1145, %v1159
    %v1162 = vlaneseq
    %v1163 = vshrl.u32 %v1162, 7
    %v1164 = vsub.s32 0, %v1163
    %v1165 = vrot.slane %v28, %v1164
    %v1166 = vmul.f32 %v1160, %v1165
    %v1167 = vmul.f32 %v1161, %v1165
    %v1168 = vlaneseq
    %v1169 = vshrl.u32 %v1168, 7
    %v1170 = vsub.s32 0, %v1169
    %v1171 = vrot.slane %v29, %v1170
    %v1172 = vadd.f32 %v1166, %v1171
    %v1173 = vadd.f32 %v1167, %v1171
    %v1174 = vld [vmem:[%s4] sm:$0xff]
    %v1175 = vld [vmem:[%s4 + $0x8] sm:$0xff]
    %v1176 = vld [vmem:[%s4 + $0x10] sm:$0xff]
    %v1177 = vld [vmem:[%s4 + $0x18] sm:$0xff]
    %v1178 = vlaneseq
    %v1179 = vshrl.u32 %v1178, 7
    %v1180 = vsub.s32 0, %v1179
    %v1181 = vrot.slane %v32, %v1180
    %v1183 = vsel %vm34, %v1172, 0
    %v1186 = vsel %vm34, %v1173, 0
    %1188 = vmatprep.subr.mxu0 0.0
    %1189 = vmatpush1.msra.mxu0 %v1174
    %1190 = vmatprep.subr.mxu0 0.0
    %1191 = vmatpush1.msra.mxu0 %v1175
    %1192 = vmatprep.subr.mxu0 0.0
    %1193 = vmatpush1.msra.mxu0 %v1176
    %1194 = vmatprep.subr.mxu0 0.0
    %1195 = vmatpush1.msra.mxu0 %v1177
    %1196 = vmatprep.subr.mxu0 0.0
    %1197 = vmatpush1.msra.mxu0 0.0
    %1198 = vmatprep.subr.mxu0 0.0
    %1199 = vmatpush1.msra.mxu0 0.0
    %1200 = vmatprep.subr.mxu0 0.0
    %1201 = vmatpush1.msra.mxu0 0.0
    %1202 = vmatprep.subr.mxu0 0.0
    %1203 = vmatpush1.msra.mxu0 0.0
    %1204 = vmatprep.subr.mxu0 0.0
    %1205 = vmatpush1.msra.mxu0 0.0
    %1206 = vmatprep.subr.mxu0 0.0
    %1207 = vmatpush1.msra.mxu0 0.0
    %1208 = vmatprep.subr.mxu0 0.0
    %1209 = vmatpush1.msra.mxu0 0.0
    %1210 = vmatprep.subr.mxu0 0.0
    %1211 = vmatpush1.msra.mxu0 0.0
    %1212 = vmatprep.subr.mxu0 0.0
    %1213 = vmatpush1.msra.mxu0 0.0
    %1214 = vmatprep.subr.mxu0 0.0
    %1215 = vmatpush1.msra.mxu0 0.0
    %1216 = vmatprep.subr.mxu0 0.0
    %1217 = vmatpush1.msra.mxu0 0.0
    %1218 = vmatprep.subr.mxu0 0.0
    %1219 = vmatpush1.msra.mxu0 0.0
    %1220 = vmatprep.subr.mxu0 0.0
    %1221 = vmatpush1.msra.mxu0 0.0
    %1222 = vmatprep.subr.mxu0 0.0
    %1223 = vmatpush1.msra.mxu0 0.0
    %1224 = vmatprep.subr.mxu0 0.0
    %1225 = vmatpush1.msra.mxu0 0.0
    %1226 = vmatprep.subr.mxu0 0.0
    %1227 = vmatpush1.msra.mxu0 0.0
    %1228 = vmatprep.subr.mxu0 0.0
    %1229 = vmatpush1.msra.mxu0 0.0
    %1230 = vmatprep.subr.mxu0 0.0
    %1231 = vmatpush1.msra.mxu0 0.0
    %1232 = vmatprep.subr.mxu0 0.0
    %1233 = vmatpush1.msra.mxu0 0.0
    %1234 = vmatprep.subr.mxu0 0.0
    %1235 = vmatpush1.msra.mxu0 0.0
    %1236 = vmatprep.subr.mxu0 0.0
    %1237 = vmatpush1.msra.mxu0 0.0
    %1238 = vmatprep.subr.mxu0 0.0
    %1239 = vmatpush1.msra.mxu0 0.0
    %1240 = vmatprep.subr.mxu0 0.0
    %1241 = vmatpush1.msra.mxu0 0.0
    %1242 = vmatprep.subr.mxu0 0.0
    %1243 = vmatpush1.msra.mxu0 0.0
    %1244 = vmatprep.subr.mxu0 0.0
    %1245 = vmatpush1.msra.mxu0 0.0
    %1246 = vmatprep.subr.mxu0 0.0
    %1247 = vmatpush1.msra.mxu0 0.0
    %1248 = vmatprep.subr.mxu0 0.0
    %1249 = vmatpush1.msra.mxu0 0.0
    %1250 = vmatprep.subr.mxu0 0.0
    %1251 = vmatpush1.msra.mxu0 0.0
    %1252 = vmatprep.mubr.f32.mxu0 0.0
    %1253 = vmatmul.mubr.f32.gmra.mrb[0].mxu0 %v1183
    %v1254 = vpop.f32.mrb[0].mxu0
    %v1255 = vadd.f32 %v1181, %v1254
    %v1256 = vpop.f32.mrb[0].mxu0
    %1257 = vmatprep.mubr.f32.mxu0 0.0
    %1258 = vmatmul.mubr.f32.gmra.mrb[0].mxu0 %v1186
    %v1259 = vpop.f32.mrb[0].mxu0
    %v1260 = vadd.f32 %v1181, %v1259
    %v1261 = vpop.f32.mrb[0].mxu0
    %1262 = vdwg.mxu0
    %v1263 = vmul.f32 %v1255, 0.5
    %v1264 = vmul.f32 %v1260, 0.5
    %v1265 = vmul.f32 %v1255, 0.70710677
    %v1266 = vmul.f32 %v1260, 0.70710677
    %v1267 = verf.f32.pop %v1265
    %v1268 = verf.f32.pop %v1266
    %v1269 = vadd.f32 %v1267, 1.0
    %v1270 = vadd.f32 %v1268, 1.0
    %v1271 = vmul.f32 %v1263, %v1269
    %v1272 = vmul.f32 %v1264, %v1270
    %v1273 = vld [vmem:[%s5] sm:$0xff]
    %v1274 = vld [vmem:[%s5 + $0x8] sm:$0xff]
    %v1275 = vld [vmem:[%s5 + $0x10] sm:$0xff]
    %v1276 = vld [vmem:[%s5 + $0x18] sm:$0xff]
    %v1277 = vld [vmem:[%s5 + $0x20] sm:$0xff]
    %v1278 = vld [vmem:[%s5 + $0x28] sm:$0xff]
    %v1279 = vld [vmem:[%s5 + $0x30] sm:$0xff]
    %v1280 = vld [vmem:[%s5 + $0x38] sm:$0xff]
    %v1281 = vld [vmem:[%s5 + $0x40] sm:$0xff]
    %v1282 = vld [vmem:[%s5 + $0x48] sm:$0xff]
    %v1283 = vld [vmem:[%s5 + $0x50] sm:$0xff]
    %v1284 = vld [vmem:[%s5 + $0x58] sm:$0xff]
    %v1285 = vld [vmem:[%s5 + $0x60] sm:$0xff]
    %v1286 = vld [vmem:[%s5 + $0x68] sm:$0xff]
    %v1287 = vld [vmem:[%s5 + $0x70] sm:$0xff]
    %v1288 = vld [vmem:[%s5 + $0x78] sm:$0xff]
    %v1289 = vlaneseq
    %v1290 = vshrl.u32 %v1289, 7
    %v1291 = vsub.s32 0, %v1290
    %v1292 = vrot.slane %v33, %v1291
    %1293 = vmatprep.subr.mxu0 0.0
    %1294 = vmatpush1.msra.mxu0 %v1273
    %1295 = vmatprep.subr.mxu0 0.0
    %1296 = vmatpush1.msra.mxu0 %v1274
    %1297 = vmatprep.subr.mxu0 0.0
    %1298 = vmatpush1.msra.mxu0 %v1275
    %1299 = vmatprep.subr.mxu0 0.0
    %1300 = vmatpush1.msra.mxu0 %v1276
    %1301 = vmatprep.subr.mxu0 0.0
    %1302 = vmatpush1.msra.mxu0 %v1277
    %1303 = vmatprep.subr.mxu0 0.0
    %1304 = vmatpush1.msra.mxu0 %v1278
    %1305 = vmatprep.subr.mxu0 0.0
    %1306 = vmatpush1.msra.mxu0 %v1279
    %1307 = vmatprep.subr.mxu0 0.0
    %1308 = vmatpush1.msra.mxu0 %v1280
    %1309 = vmatprep.subr.mxu0 0.0
    %1310 = vmatpush1.msra.mxu0 %v1281
    %1311 = vmatprep.subr.mxu0 0.0
    %1312 = vmatpush1.msra.mxu0 %v1282
    %1313 = vmatprep.subr.mxu0 0.0
    %1314 = vmatpush1.msra.mxu0 %v1283
    %1315 = vmatprep.subr.mxu0 0.0
    %1316 = vmatpush1.msra.mxu0 %v1284
    %1317 = vmatprep.subr.mxu0 0.0
    %1318 = vmatpush1.msra.mxu0 %v1285
    %1319 = vmatprep.subr.mxu0 0.0
    %1320 = vmatpush1.msra.mxu0 %v1286
    %1321 = vmatprep.subr.mxu0 0.0
    %1322 = vmatpush1.msra.mxu0 %v1287
    %1323 = vmatprep.subr.mxu0 0.0
    %1324 = vmatpush1.msra.mxu0 %v1288
    %1325 = vmatprep.subr.mxu0 0.0
    %1326 = vmatpush1.msra.mxu0 0.0
    %1327 = vmatprep.subr.mxu0 0.0
    %1328 = vmatpush1.msra.mxu0 0.0
    %1329 = vmatprep.subr.mxu0 0.0
    %1330 = vmatpush1.msra.mxu0 0.0
    %1331 = vmatprep.subr.mxu0 0.0
    %1332 = vmatpush1.msra.mxu0 0.0
    %1333 = vmatprep.subr.mxu0 0.0
    %1334 = vmatpush1.msra.mxu0 0.0
    %1335 = vmatprep.subr.mxu0 0.0
    %1336 = vmatpush1.msra.mxu0 0.0
    %1337 = vmatprep.subr.mxu0 0.0
    %1338 = vmatpush1.msra.mxu0 0.0
    %1339 = vmatprep.subr.mxu0 0.0
    %1340 = vmatpush1.msra.mxu0 0.0
    %1341 = vmatprep.subr.mxu0 0.0
    %1342 = vmatpush1.msra.mxu0 0.0
    %1343 = vmatprep.subr.mxu0 0.0
    %1344 = vmatpush1.msra.mxu0 0.0
    %1345 = vmatprep.subr.mxu0 0.0
    %1346 = vmatpush1.msra.mxu0 0.0
    %1347 = vmatprep.subr.mxu0 0.0
    %1348 = vmatpush1.msra.mxu0 0.0
    %1349 = vmatprep.subr.mxu0 0.0
    %1350 = vmatpush1.msra.mxu0 0.0
    %1351 = vmatprep.subr.mxu0 0.0
    %1352 = vmatpush1.msra.mxu0 0.0
    %1353 = vmatprep.subr.mxu0 0.0
    %1354 = vmatpush1.msra.mxu0 0.0
    %1355 = vmatprep.subr.mxu0 0.0
    %1356 = vmatpush1.msra.mxu0 0.0
    %1357 = vmatprep.mubr.f32.mxu0 0.0
    %1358 = vmatmul.mubr.f32.gmra.mrb[0].mxu0 %v1271
    %v1359 = vpop.f32.mrb[0].mxu0
    %v1360 = vadd.f32 %v1292, %v1359
    %v1361 = vpop.f32.mrb[0].mxu0
    %1362 = vmatprep.mubr.f32.mxu0 0.0
    %1363 = vmatmul.mubr.f32.gmra.mrb[0].mxu0 %v1272
    %v1364 = vpop.f32.mrb[0].mxu0
    %v1365 = vadd.f32 %v1292, %v1364
    %v1366 = vpop.f32.mrb[0].mxu0
    %1367 = vdwg.mxu0
    %v1368 = vadd.f32 %v1134, %v1360
    %v1369 = vadd.f32 %v1135, %v1365
    %1370 = vst.msk [vmem:[#allocation2] sm:$0xff] %vm34, %v1368
    %1371 = vst.msk [vmem:[#allocation2 + $0x8] sm:$0xff] %vm34, %v1369
    // Predicated region
    $region26: #{residual_attention_block.1} parent=1 // pred_check
      _
    $region27: #{residual_attention_block.1} parent=1 // pred_check_branch
      %1373 = sbr.rel (0) target = $region29
    $region28: #{residual_attention_block.1} parent=1 // pred_region
      %s1375 = ssub.s32 256, 256
      %1376 = vsyncadd [#allocation3], %s1375
      %s1377 = sshll.u32 [#allocation2], 4
      %s1378 = int_to_ptr.vmem [resolvable:$true] %s1377
      %1383 = dma.vmem_to_hbm [thread:$0]  %s1378, 256, %s6, [#allocation3], 128, 128, 8
    $region29: #{residual_attention_block.1} parent=1 // pred_fallthru
      _
    // Predicated region
    $region30: #{residual_attention_block.1} parent=1 // pred_check
      _
    $region31: #{residual_attention_block.1} parent=1 // pred_check_branch
      %1385 = sbr.rel (0) target = $region33
    $region32: #{residual_attention_block.1} parent=1 // pred_region
      %1386 = dma.done [#allocation3], 256
    $region33: #{residual_attention_block.1} parent=1 // pred_fallthru
      _
    %1387 = vsyncpa [#allocation3], 1

</llo_original>
